<compile_context>
chip_gen: v7x
topology: tpu7x:2x2x1
jax: 0.10.0
libtpu: 0.0.40
codegen_flags: <defaults>
</compile_context>

<pallas_src>
import functools

import jax
import jax.numpy as jnp
from jax.experimental import pallas as pl
from jax.experimental.pallas import tpu as pltpu

LN_EPS = 1e-5  # PyTorch nn.LayerNorm default


def _round_up(x, m):
    return ((x + m - 1) // m) * m


# ----------------------------------------------------------------------------
# Fused kernel: for one row tile, BOTH branches (0 = series, 1 = freq):
#   attn  = ctx @ [wo_series | wo_freq]          (one wide bf16 MXU matmul)
#   x_b   = tok_b + attn[:, b]                   (dropout = identity)
#   y_b   = LN1_b(x_b)
#   h_b   = relu(y_b @ w1_b + b1_b)              (k=1 conv == linear)
#   z_b   = h_b @ w2_b + b2_b
#   out_b = LN2_b(z_b + y_b)
# The lane dim is zero-padded to Dp (multiple of 128); LayerNorm statistics use
# an explicit lane mask so padded lanes never contaminate mean/variance.
# ----------------------------------------------------------------------------
def _encoder_pair_kernel(tok_ref, ctx_ref, wo_ref, w1_ref, w2_ref, vec_ref,
                         out_ref, *, d_model):
    Dp = tok_ref.shape[-1]
    Fp = w1_ref.shape[-1]
    inv_d = 1.0 / d_model
    lane_mask = jax.lax.broadcasted_iota(jnp.int32, (1, Dp), 1) < d_model

    def layer_norm(x, g, b):
        mu = jnp.sum(x, axis=-1, keepdims=True) * inv_d     # padded lanes are 0
        xc = jnp.where(lane_mask, x - mu, 0.0)
        var = jnp.sum(xc * xc, axis=-1, keepdims=True) * inv_d
        return xc * jax.lax.rsqrt(var + LN_EPS) * g + b      # padded g/b are 0

    # Attention output projections for both branches in one matmul:
    # (rows, Dp) @ (Dp, 2*Dp) -> (rows, 2*Dp).  Operands arrive pre-cast bf16.
    attn_both = jnp.dot(ctx_ref[...], wo_ref[...],
                        preferred_element_type=jnp.float32)

    for br in range(2):                                      # static 2-way unroll
        vecs = vec_ref[br]                                   # (8, Vp) f32, packed
        b1 = vecs[0:1, :Fp]
        b2 = vecs[1:2, :Dp]
        g1 = vecs[2:3, :Dp]
        be1 = vecs[3:4, :Dp]
        g2 = vecs[4:5, :Dp]
        be2 = vecs[5:6, :Dp]

        # First residual (dropout = identity in eval mode).
        x = tok_ref[br].astype(jnp.float32) + attn_both[:, br * Dp:(br + 1) * Dp]
        y = layer_norm(x, g1, be1)

        # conv1(k=1) -> ReLU -> conv2(k=1): bf16 MXU operands, f32 accumulation.
        h = jnp.dot(y.astype(jnp.bfloat16), w1_ref[br],
                    preferred_element_type=jnp.float32) + b1
        h = jnp.maximum(h, 0.0)                              # activation = relu
        z = jnp.dot(h.astype(jnp.bfloat16), w2_ref[br],
                    preferred_element_type=jnp.float32) + b2

        # Second residual + LayerNorm 2.
        out_ref[br] = layer_norm(z + y, g2, be2).astype(out_ref.dtype)


def _vmem_bytes(tile_rows, Dp, Fp, Vp, weight_buffers):
    """Actual VMEM block footprint (+2x headroom), capped below v7x's 64 MiB."""
    act = 2 * (2 * tile_rows * Dp * 4)        # tokens  (f32, double-buffered)
    act += 2 * (tile_rows * Dp * 2)           # ctx     (bf16, double-buffered)
    act += 2 * (2 * tile_rows * Dp * 4)       # output  (f32, double-buffered)
    wts = weight_buffers * (
        (Dp * 2 * Dp) * 2                     # wo_cat  (bf16)
        + 2 * (Dp * Fp) * 2                   # w1      (bf16)
        + 2 * (Fp * Dp) * 2                   # w2      (bf16)
        + 2 * 8 * Vp * 4)                     # packed vectors (f32)
    need = act + wts
    return int(min(max(2 * need, 32 << 20), 48 << 20))


def encoder_pair(tokens, ctx, wo_cat, w1, w2, vecs, *, d_model, tile_rows,
                 single_buffer_weights=True):
    """Both EncoderLayer branches in one fused pallas_call.

    tokens : (2, Rp, Dp) f32   stacked, row/lane padded tokens
    ctx    : (Rp, Dp)    bf16  shared attention context (pre output projection)
    wo_cat : (Dp, 2*Dp)  bf16  [wo_series | wo_freq] concatenated along N
    w1     : (2, Dp, Fp) bf16  stacked conv1 weights (k=1 conv == linear)
    w2     : (2, Fp, Dp) bf16  stacked conv2 weights
    vecs   : (2, 8, Vp)  f32   packed rows [b1; b2; g1; be1; g2; be2; 0; 0]
    """
    _, Rp, Dp = tokens.shape
    Fp = w1.shape[-1]
    Vp = vecs.shape[-1]
    n_row_tiles = Rp // tile_rows

    if single_buffer_weights:
        # Grid-constant blocks: one VMEM buffer is enough (halves weight
        # residency vs. the default double-buffer).
        def const_spec(shape, index_map):
            return pl.BlockSpec(shape, index_map, pipeline_mode=pl.Buffered(1))
    else:
        def const_spec(shape, index_map):
            return pl.BlockSpec(shape, index_map)

    kernel = functools.partial(_encoder_pair_kernel, d_model=d_model)
    weight_buffers = 1 if single_buffer_weights else 2

    return pl.pallas_call(
        kernel,
        out_shape=jax.ShapeDtypeStruct((2, Rp, Dp), tokens.dtype),
        grid_spec=pltpu.PrefetchScalarGridSpec(
            num_scalar_prefetch=0,
            grid=(n_row_tiles,),               # row tiles only; branches fused
            in_specs=[
                pl.BlockSpec((2, tile_rows, Dp), lambda r: (0, r, 0)),
                pl.BlockSpec((tile_rows, Dp),    lambda r: (r, 0)),
                const_spec((Dp, 2 * Dp),         lambda r: (0, 0)),
                const_spec((2, Dp, Fp),          lambda r: (0, 0, 0)),
                const_spec((2, Fp, Dp),          lambda r: (0, 0, 0)),
                const_spec((2, 8, Vp),           lambda r: (0, 0, 0)),
            ],
            out_specs=pl.BlockSpec((2, tile_rows, Dp), lambda r: (0, r, 0)),
        ),
        compiler_params=pltpu.CompilerParams(
            dimension_semantics=("parallel",),   # shards row tiles across TCs
            vmem_limit_bytes=_vmem_bytes(tile_rows, Dp, Fp, Vp, weight_buffers)),
    )(tokens, ctx, wo_cat, w1, w2, vecs)


_WEIGHT_SINGLE_BUFFER = None   # resolved at first call


def _run_encoder_pair(tokens, ctx, wo_cat, w1, w2, vecs, *, d_model, tile_rows):
    """Call encoder_pair with single-buffered weights, falling back to the
    default double-buffer if pl.Buffered(1) is unsupported on this backend."""
    global _WEIGHT_SINGLE_BUFFER
    if _WEIGHT_SINGLE_BUFFER is None:
        try:
            out = encoder_pair(tokens, ctx, wo_cat, w1, w2, vecs,
                               d_model=d_model, tile_rows=tile_rows,
                               single_buffer_weights=True)
            _WEIGHT_SINGLE_BUFFER = True
            return out
        except Exception:
            _WEIGHT_SINGLE_BUFFER = False
    return encoder_pair(tokens, ctx, wo_cat, w1, w2, vecs,
                        d_model=d_model, tile_rows=tile_rows,
                        single_buffer_weights=_WEIGHT_SINGLE_BUFFER)


# ----------------------------------------------------------------------------
# Injected attention module stand-in (plain JAX glue, deterministic params).
# Returns the shared context BEFORE the per-branch output projections (those
# are fused into the Pallas kernel), plus attn / prior / sigma.
# ----------------------------------------------------------------------------
def attention_standin(freq_tok, series_tok, params, attn_mask=None):
    B, L, D = series_tok.shape
    H = params["n_heads"]
    dk = D // H

    q = (freq_tok @ params["wq"]).reshape(B, L, H, dk)
    k = (series_tok @ params["wk"]).reshape(B, L, H, dk)
    v = (series_tok @ params["wv"]).reshape(B, L, H, dk)
    sigma = freq_tok @ params["wsig"]                      # (B, L, H)

    scores = jnp.einsum("blhd,bshd->bhls", q, k) / jnp.sqrt(jnp.float32(dk))
    attn = jax.nn.softmax(scores, axis=-1)                 # (B, H, L, L)

    sig = jnp.transpose(sigma, (0, 2, 1))                  # (B, H, L)
    sig = jax.nn.sigmoid(sig * 5.0) + 1e-5
    sig = 3.0 * jnp.power(3.0, sig) - 1.0
    dist = jnp.abs(jnp.arange(L)[:, None]
                   - jnp.arange(L)[None, :]).astype(jnp.float32)
    prior = (1.0 / (jnp.sqrt(2.0 * jnp.pi) * sig[..., None]) *
             jnp.exp(-(dist[None, None] ** 2) / (2.0 * sig[..., None] ** 2)))

    ctx = jnp.einsum("bhls,bshd->blhd", attn, v).reshape(B, L, D)
    return ctx, attn, prior, sigma


# ----------------------------------------------------------------------------
# EncoderLayer forward (wrapper): pack / pad operands, call the fused kernel.
# ----------------------------------------------------------------------------
def encoder_layer_forward(series_token, freq_token, params, attn_mask=None,
                          tile_rows_target=512):
    B, L, D = series_token.shape
    F = params["series_w1"].shape[1]
    Dp = _round_up(D, 128)
    Fp = _round_up(F, 128)
    Vp = max(Dp, Fp)          # packed vectors hold both Dp- and Fp-length rows

    ctx, attn, mask, sigma = attention_standin(
        freq_token, series_token, params["attn"], attn_mask)

    # Flatten (B, L) -> rows; pad rows to the tile size (multiple of 16) and
    # lanes to a multiple of 128 (lane-dense loads/stores).
    BL = B * L
    if BL <= tile_rows_target:
        tile_rows = _round_up(BL, 16)
        Rp = tile_rows
    else:
        tile_rows = tile_rows_target
        Rp = _round_up(BL, tile_rows)

    def pad_rows(x2d):
        return jnp.pad(x2d, ((0, Rp - BL), (0, Dp - D)))

    tokens = jnp.stack([pad_rows(series_token.reshape(BL, D)),
                        pad_rows(freq_token.reshape(BL, D))])     # (2, Rp, Dp)
    # TODO(synk): tokens / output could be stored bf16 on mem-bound v6e if the
    # surrounding model tolerates it; kept f32 to match the PyTorch module.
    ctx_p = pad_rows(ctx.reshape(BL, D)).astype(jnp.bfloat16)     # (Rp, Dp)

    def pad2(w, r, c):
        return jnp.pad(w, ((0, r - w.shape[0]), (0, c - w.shape[1])))

    # Weights live in HBM pre-cast to bf16 (MXU-native): no per-grid-step
    # f32->bf16 casts in the kernel; half the weight DMA bytes / VMEM.
    wo_cat = jnp.concatenate(
        [pad2(params["attn"]["wo_series"], Dp, Dp),
         pad2(params["attn"]["wo_freq"], Dp, Dp)],
        axis=1).astype(jnp.bfloat16)                              # (Dp, 2*Dp)
    w1 = jnp.stack([pad2(params["series_w1"], Dp, Fp),
                    pad2(params["freq_w1"], Dp, Fp)]).astype(jnp.bfloat16)
    w2 = jnp.stack([pad2(params["series_w2"], Fp, Dp),
                    pad2(params["freq_w2"], Fp, Dp)]).astype(jnp.bfloat16)

    def pack_vecs(prefix):
        def padded(v):
            return jnp.pad(v, (0, Vp - v.shape[0]))
        rows = [padded(params[f"{prefix}_b1"]),
                padded(params[f"{prefix}_b2"]),
                padded(params[f"{prefix}_g1"]),
                padded(params[f"{prefix}_be1"]),
                padded(params[f"{prefix}_g2"]),
                padded(params[f"{prefix}_be2"]),
                jnp.zeros((Vp,), jnp.float32),
                jnp.zeros((Vp,), jnp.float32)]
        return jnp.stack(rows)                                    # (8, Vp)

    vecs = jnp.stack([pack_vecs("series"), pack_vecs("freq")])    # (2, 8, Vp)

    out = _run_encoder_pair(tokens, ctx_p, wo_cat, w1, w2, vecs,
                            d_model=D, tile_rows=tile_rows)       # (2, Rp, Dp)

    series_out = out[0, :BL, :D].reshape(B, L, D)
    freq_out = out[1, :BL, :D].reshape(B, L, D)
    return series_out, freq_out, attn, mask, sigma


# Pure-JAX reference of one branch (same bf16 matmul operands as the kernel).
def _branch_ref(tok, ctx, wo, w1, b1, w2, b2, g1, be1, g2, be2):
    def ln(x, g, b):
        mu = jnp.mean(x, axis=-1, keepdims=True)
        var = jnp.mean((x - mu) ** 2, axis=-1, keepdims=True)
        return (x - mu) * jax.lax.rsqrt(var + LN_EPS) * g + b

    def bdot(a, b_):
        return jnp.dot(a.astype(jnp.bfloat16), b_.astype(jnp.bfloat16),
                       preferred_element_type=jnp.float32)

    y = ln(tok + bdot(ctx, wo), g1, be1)
    h = jnp.maximum(bdot(y, w1) + b1, 0.0)
    z = bdot(h, w2) + b2
    return ln(z + y, g2, be2)


def make_params(key, d_model, d_ff, n_heads):
    ks = jax.random.split(key, 12)
    s = 0.05
    attn = {
        "n_heads": n_heads,
        "wq": jax.random.normal(ks[0], (d_model, d_model), jnp.float32) * s,
        "wk": jax.random.normal(ks[1], (d_model, d_model), jnp.float32) * s,
        "wv": jax.random.normal(ks[2], (d_model, d_model), jnp.float32) * s,
        "wsig": jax.random.normal(ks[3], (d_model, n_heads), jnp.float32) * s,
        "wo_series": jax.random.normal(ks[4], (d_model, d_model), jnp.float32) * s,
        "wo_freq": jax.random.normal(ks[5], (d_model, d_model), jnp.float32) * s,
    }
    def branch(k1, k2):
        return {
            "w1": jax.random.normal(k1, (d_model, d_ff), jnp.float32) * s,
            "b1": jnp.linspace(-0.1, 0.1, d_ff, dtype=jnp.float32),
            "w2": jax.random.normal(k2, (d_ff, d_model), jnp.float32) * s,
            "b2": jnp.linspace(0.1, -0.1, d_model, dtype=jnp.float32),
            "g1": jnp.ones((d_model,), jnp.float32),
            "be1": jnp.zeros((d_model,), jnp.float32),
            "g2": jnp.ones((d_model,), jnp.float32),
            "be2": jnp.zeros((d_model,), jnp.float32),
        }
    sb = branch(ks[6], ks[7])
    fb = branch(ks[8], ks[9])
    params = {"attn": attn}
    for name, b in (("series", sb), ("freq", fb)):
        for k, v in b.items():
            params[f"{name}_{k}"] = v
    return params


if __name__ == "__main__":
    B, L, d_model, n_heads = 2, 8, 32, 4
    d_ff = 4 * d_model  # 128

    key = jax.random.PRNGKey(0)
    k_s, k_f, k_p = jax.random.split(key, 3)
    series_token = jax.random.normal(k_s, (B, L, d_model), jnp.float32)
    freq_token = jax.random.normal(k_f, (B, L, d_model), jnp.float32)
    params = make_params(k_p, d_model, d_ff, n_heads)

    series_out, freq_out, attn, mask, sigma = encoder_layer_forward(
        series_token, freq_token, params)
    jax.block_until_ready((series_out, freq_out, attn, mask, sigma))

    # Correctness check of the fused Pallas kernel vs a pure-JAX reference.
    ctx, _, _, _ = attention_standin(freq_token, series_token, params["attn"])
    ref_s = _branch_ref(series_token, ctx, params["attn"]["wo_series"],
                        params["series_w1"], params["series_b1"],
                        params["series_w2"], params["series_b2"],
                        params["series_g1"], params["series_be1"],
                        params["series_g2"], params["series_be2"])
    ref_f = _branch_ref(freq_token, ctx, params["attn"]["wo_freq"],
                        params["freq_w1"], params["freq_b1"],
                        params["freq_w2"], params["freq_b2"],
                        params["freq_g1"], params["freq_be1"],
                        params["freq_g2"], params["freq_be2"])
    assert jnp.allclose(series_out, ref_s, atol=5e-3, rtol=5e-3)
    assert jnp.allclose(freq_out, ref_f, atol=5e-3, rtol=5e-3)

    print("KERNEL_OK")
</pallas_src>

<mosaic_0001>
module attributes {stable_mosaic.version = 11 : i64} {
  func.func @_encoder_pair_kernel(%arg0: i32, %arg1: memref<2x16x128xf32, #tpu.memory_space<vmem>>, %arg2: memref<16x128xbf16, #tpu.memory_space<vmem>>, %arg3: memref<128x256xbf16, #tpu.memory_space<vmem>>, %arg4: memref<2x128x128xbf16, #tpu.memory_space<vmem>>, %arg5: memref<2x128x128xbf16, #tpu.memory_space<vmem>>, %arg6: memref<2x8x128xf32, #tpu.memory_space<vmem>>, %arg7: memref<2x16x128xf32, #tpu.memory_space<vmem>>) attributes {dimension_semantics = [#tpu.dimension_semantics<parallel>], iteration_bounds = array<i64: 1>, scalar_prefetch = 0 : i64, scratch_operands = 0 : i64, tpu.core_type = #tpu.core_type<tc>, window_params = [{transform_indices = @transform_0, window_bounds = array<i64: 2, 16, 128>}, {transform_indices = @transform_1, window_bounds = array<i64: 16, 128>}, {pipeline_mode = #tpu.pipeline_mode<synchronous>, transform_indices = @transform_2, window_bounds = array<i64: 128, 256>}, {pipeline_mode = #tpu.pipeline_mode<synchronous>, transform_indices = @transform_3, window_bounds = array<i64: 2, 128, 128>}, {pipeline_mode = #tpu.pipeline_mode<synchronous>, transform_indices = @transform_4, window_bounds = array<i64: 2, 128, 128>}, {pipeline_mode = #tpu.pipeline_mode<synchronous>, transform_indices = @transform_5, window_bounds = array<i64: 2, 8, 128>}, {transform_indices = @transform_6, window_bounds = array<i64: 2, 16, 128>}]} {
    %0 = tpu.iota {dimensions = array<i32: 1>} : vector<1x128xi32>
    %c32_i32 = arith.constant 32 : i32
    %1 = vector.broadcast %c32_i32 : i32 to vector<1x128xi32>
    %2 = arith.cmpi slt, %0, %1 : vector<1x128xi32>
    %c0 = arith.constant 0 : index
    %c0_0 = arith.constant 0 : index
    %3 = vector.load %arg2[%c0, %c0_0] : memref<16x128xbf16, #tpu.memory_space<vmem>>, vector<16x128xbf16>
    %c0_1 = arith.constant 0 : index
    %c0_2 = arith.constant 0 : index
    %4 = vector.load %arg3[%c0_1, %c0_2] : memref<128x256xbf16, #tpu.memory_space<vmem>>, vector<128x256xbf16>
    %cst = arith.constant dense<0.000000e+00> : vector<16x256xf32>
    %5 = tpu.matmul %3, %4, %cst {dimension_numbers = #tpu.dot_dimension_numbers<[1], [0], [0], [1], [0, 0, 1, 1], [], []>} : vector<16x128xbf16>, vector<128x256xbf16>, vector<16x256xf32> -> vector<16x256xf32>
    %c0_3 = arith.constant 0 : index
    %c0_4 = arith.constant 0 : index
    %c0_5 = arith.constant 0 : index
    %6 = vector.load %arg6[%c0_3, %c0_4, %c0_5] : memref<2x8x128xf32, #tpu.memory_space<vmem>>, vector<1x8x128xf32>
    %7 = vector.shape_cast %6 : vector<1x8x128xf32> to vector<8x128xf32>
    %8 = vector.extract_strided_slice %7 {offsets = [0, 0], sizes = [1, 128], strides = [1, 1]} : vector<8x128xf32> to vector<1x128xf32>
    %9 = vector.extract_strided_slice %7 {offsets = [1, 0], sizes = [1, 128], strides = [1, 1]} : vector<8x128xf32> to vector<1x128xf32>
    %10 = vector.extract_strided_slice %7 {offsets = [2, 0], sizes = [1, 128], strides = [1, 1]} : vector<8x128xf32> to vector<1x128xf32>
    %11 = vector.extract_strided_slice %7 {offsets = [3, 0], sizes = [1, 128], strides = [1, 1]} : vector<8x128xf32> to vector<1x128xf32>
    %12 = vector.extract_strided_slice %7 {offsets = [4, 0], sizes = [1, 128], strides = [1, 1]} : vector<8x128xf32> to vector<1x128xf32>
    %13 = vector.extract_strided_slice %7 {offsets = [5, 0], sizes = [1, 128], strides = [1, 1]} : vector<8x128xf32> to vector<1x128xf32>
    %c0_6 = arith.constant 0 : index
    %c0_7 = arith.constant 0 : index
    %c0_8 = arith.constant 0 : index
    %14 = vector.load %arg1[%c0_6, %c0_7, %c0_8] : memref<2x16x128xf32, #tpu.memory_space<vmem>>, vector<1x16x128xf32>
    %15 = vector.shape_cast %14 : vector<1x16x128xf32> to vector<16x128xf32>
    %16 = vector.extract_strided_slice %5 {offsets = [0, 0], sizes = [16, 128], strides = [1, 1]} : vector<16x256xf32> to vector<16x128xf32>
    %17 = arith.addf %15, %16 : vector<16x128xf32>
    %cst_9 = arith.constant dense<0.000000e+00> : vector<16xf32>
    %18 = vector.multi_reduction <add>, %17, %cst_9 [1] : vector<16x128xf32> to vector<16xf32>
    %19 = vector.shape_cast %18 : vector<16xf32> to vector<16x1xf32>
    %cst_10 = arith.constant 3.125000e-02 : f32
    %20 = vector.broadcast %cst_10 : f32 to vector<16x1xf32>
    %21 = arith.mulf %19, %20 : vector<16x1xf32>
    %22 = vector.broadcast %21 : vector<16x1xf32> to vector<16x128xf32>
    %23 = arith.subf %17, %22 : vector<16x128xf32>
    %cst_11 = arith.constant 0.000000e+00 : f32
    %24 = vector.shape_cast %2 : vector<1x128xi1> to vector<1x128xi1>
    %25 = vector.broadcast %24 : vector<1x128xi1> to vector<16x128xi1>
    %26 = vector.broadcast %cst_11 : f32 to vector<16x128xf32>
    %27 = arith.select %25, %23, %26 : vector<16x128xi1>, vector<16x128xf32>
    %28 = arith.mulf %27, %27 : vector<16x128xf32>
    %cst_12 = arith.constant dense<0.000000e+00> : vector<16xf32>
    %29 = vector.multi_reduction <add>, %28, %cst_12 [1] : vector<16x128xf32> to vector<16xf32>
    %30 = vector.shape_cast %29 : vector<16xf32> to vector<16x1xf32>
    %cst_13 = arith.constant 3.125000e-02 : f32
    %31 = vector.broadcast %cst_13 : f32 to vector<16x1xf32>
    %32 = arith.mulf %30, %31 : vector<16x1xf32>
    %cst_14 = arith.constant 9.99999974E-6 : f32
    %33 = vector.broadcast %cst_14 : f32 to vector<16x1xf32>
    %34 = arith.addf %32, %33 : vector<16x1xf32>
    %35 = math.rsqrt %34 : vector<16x1xf32>
    %36 = vector.broadcast %35 : vector<16x1xf32> to vector<16x128xf32>
    %37 = arith.mulf %27, %36 : vector<16x128xf32>
    %38 = vector.broadcast %10 : vector<1x128xf32> to vector<16x128xf32>
    %39 = arith.mulf %37, %38 : vector<16x128xf32>
    %40 = vector.broadcast %11 : vector<1x128xf32> to vector<16x128xf32>
    %41 = arith.addf %39, %40 : vector<16x128xf32>
    %42 = arith.truncf %41 : vector<16x128xf32> to vector<16x128xbf16>
    %c0_15 = arith.constant 0 : index
    %c0_16 = arith.constant 0 : index
    %c0_17 = arith.constant 0 : index
    %43 = vector.load %arg4[%c0_15, %c0_16, %c0_17] : memref<2x128x128xbf16, #tpu.memory_space<vmem>>, vector<1x128x128xbf16>
    %44 = vector.shape_cast %43 : vector<1x128x128xbf16> to vector<128x128xbf16>
    %cst_18 = arith.constant dense<0.000000e+00> : vector<16x128xf32>
    %45 = tpu.matmul %42, %44, %cst_18 {dimension_numbers = #tpu.dot_dimension_numbers<[1], [0], [0], [1], [0, 0, 1, 1], [], []>} : vector<16x128xbf16>, vector<128x128xbf16>, vector<16x128xf32> -> vector<16x128xf32>
    %46 = vector.broadcast %8 : vector<1x128xf32> to vector<16x128xf32>
    %47 = arith.addf %45, %46 : vector<16x128xf32>
    %cst_19 = arith.constant 0.000000e+00 : f32
    %48 = vector.broadcast %cst_19 : f32 to vector<16x128xf32>
    %49 = arith.maximumf %47, %48 : vector<16x128xf32>
    %50 = arith.truncf %49 : vector<16x128xf32> to vector<16x128xbf16>
    %c0_20 = arith.constant 0 : index
    %c0_21 = arith.constant 0 : index
    %c0_22 = arith.constant 0 : index
    %51 = vector.load %arg5[%c0_20, %c0_21, %c0_22] : memref<2x128x128xbf16, #tpu.memory_space<vmem>>, vector<1x128x128xbf16>
    %52 = vector.shape_cast %51 : vector<1x128x128xbf16> to vector<128x128xbf16>
    %cst_23 = arith.constant dense<0.000000e+00> : vector<16x128xf32>
    %53 = tpu.matmul %50, %52, %cst_23 {dimension_numbers = #tpu.dot_dimension_numbers<[1], [0], [0], [1], [0, 0, 1, 1], [], []>} : vector<16x128xbf16>, vector<128x128xbf16>, vector<16x128xf32> -> vector<16x128xf32>
    %54 = vector.broadcast %9 : vector<1x128xf32> to vector<16x128xf32>
    %55 = arith.addf %53, %54 : vector<16x128xf32>
    %56 = arith.addf %55, %41 : vector<16x128xf32>
    %cst_24 = arith.constant dense<0.000000e+00> : vector<16xf32>
    %57 = vector.multi_reduction <add>, %56, %cst_24 [1] : vector<16x128xf32> to vector<16xf32>
    %58 = vector.shape_cast %57 : vector<16xf32> to vector<16x1xf32>
    %cst_25 = arith.constant 3.125000e-02 : f32
    %59 = vector.broadcast %cst_25 : f32 to vector<16x1xf32>
    %60 = arith.mulf %58, %59 : vector<16x1xf32>
    %61 = vector.broadcast %60 : vector<16x1xf32> to vector<16x128xf32>
    %62 = arith.subf %56, %61 : vector<16x128xf32>
    %cst_26 = arith.constant 0.000000e+00 : f32
    %63 = vector.shape_cast %2 : vector<1x128xi1> to vector<1x128xi1>
    %64 = vector.broadcast %63 : vector<1x128xi1> to vector<16x128xi1>
    %65 = vector.broadcast %cst_26 : f32 to vector<16x128xf32>
    %66 = arith.select %64, %62, %65 : vector<16x128xi1>, vector<16x128xf32>
    %67 = arith.mulf %66, %66 : vector<16x128xf32>
    %cst_27 = arith.constant dense<0.000000e+00> : vector<16xf32>
    %68 = vector.multi_reduction <add>, %67, %cst_27 [1] : vector<16x128xf32> to vector<16xf32>
    %69 = vector.shape_cast %68 : vector<16xf32> to vector<16x1xf32>
    %cst_28 = arith.constant 3.125000e-02 : f32
    %70 = vector.broadcast %cst_28 : f32 to vector<16x1xf32>
    %71 = arith.mulf %69, %70 : vector<16x1xf32>
    %cst_29 = arith.constant 9.99999974E-6 : f32
    %72 = vector.broadcast %cst_29 : f32 to vector<16x1xf32>
    %73 = arith.addf %71, %72 : vector<16x1xf32>
    %74 = math.rsqrt %73 : vector<16x1xf32>
    %75 = vector.broadcast %74 : vector<16x1xf32> to vector<16x128xf32>
    %76 = arith.mulf %66, %75 : vector<16x128xf32>
    %77 = vector.broadcast %12 : vector<1x128xf32> to vector<16x128xf32>
    %78 = arith.mulf %76, %77 : vector<16x128xf32>
    %79 = vector.broadcast %13 : vector<1x128xf32> to vector<16x128xf32>
    %80 = arith.addf %78, %79 : vector<16x128xf32>
    %c0_30 = arith.constant 0 : index
    %c0_31 = arith.constant 0 : index
    %c0_32 = arith.constant 0 : index
    %81 = vector.load %arg7[%c0_30, %c0_31, %c0_32] : memref<2x16x128xf32, #tpu.memory_space<vmem>>, vector<1x16x128xf32>
    %82 = vector.shape_cast %81 : vector<1x16x128xf32> to vector<16x128xf32>
    %83 = vector.shape_cast %80 : vector<16x128xf32> to vector<1x16x128xf32>
    tpu.vector_store %arg7[%c0_30, %c0_31, %c0_32], %83 {strides = array<i32>} : memref<2x16x128xf32, #tpu.memory_space<vmem>>, vector<1x16x128xf32>,
    %c1 = arith.constant 1 : index
    %c0_33 = arith.constant 0 : index
    %c0_34 = arith.constant 0 : index
    %84 = vector.load %arg6[%c1, %c0_33, %c0_34] : memref<2x8x128xf32, #tpu.memory_space<vmem>>, vector<1x8x128xf32>
    %85 = vector.shape_cast %84 : vector<1x8x128xf32> to vector<8x128xf32>
    %86 = vector.extract_strided_slice %85 {offsets = [0, 0], sizes = [1, 128], strides = [1, 1]} : vector<8x128xf32> to vector<1x128xf32>
    %87 = vector.extract_strided_slice %85 {offsets = [1, 0], sizes = [1, 128], strides = [1, 1]} : vector<8x128xf32> to vector<1x128xf32>
    %88 = vector.extract_strided_slice %85 {offsets = [2, 0], sizes = [1, 128], strides = [1, 1]} : vector<8x128xf32> to vector<1x128xf32>
    %89 = vector.extract_strided_slice %85 {offsets = [3, 0], sizes = [1, 128], strides = [1, 1]} : vector<8x128xf32> to vector<1x128xf32>
    %90 = vector.extract_strided_slice %85 {offsets = [4, 0], sizes = [1, 128], strides = [1, 1]} : vector<8x128xf32> to vector<1x128xf32>
    %91 = vector.extract_strided_slice %85 {offsets = [5, 0], sizes = [1, 128], strides = [1, 1]} : vector<8x128xf32> to vector<1x128xf32>
    %c1_35 = arith.constant 1 : index
    %c0_36 = arith.constant 0 : index
    %c0_37 = arith.constant 0 : index
    %92 = vector.load %arg1[%c1_35, %c0_36, %c0_37] : memref<2x16x128xf32, #tpu.memory_space<vmem>>, vector<1x16x128xf32>
    %93 = vector.shape_cast %92 : vector<1x16x128xf32> to vector<16x128xf32>
    %94 = vector.extract_strided_slice %5 {offsets = [0, 128], sizes = [16, 128], strides = [1, 1]} : vector<16x256xf32> to vector<16x128xf32>
    %95 = arith.addf %93, %94 : vector<16x128xf32>
    %cst_38 = arith.constant dense<0.000000e+00> : vector<16xf32>
    %96 = vector.multi_reduction <add>, %95, %cst_38 [1] : vector<16x128xf32> to vector<16xf32>
    %97 = vector.shape_cast %96 : vector<16xf32> to vector<16x1xf32>
    %cst_39 = arith.constant 3.125000e-02 : f32
    %98 = vector.broadcast %cst_39 : f32 to vector<16x1xf32>
    %99 = arith.mulf %97, %98 : vector<16x1xf32>
    %100 = vector.broadcast %99 : vector<16x1xf32> to vector<16x128xf32>
    %101 = arith.subf %95, %100 : vector<16x128xf32>
    %cst_40 = arith.constant 0.000000e+00 : f32
    %102 = vector.shape_cast %2 : vector<1x128xi1> to vector<1x128xi1>
    %103 = vector.broadcast %102 : vector<1x128xi1> to vector<16x128xi1>
    %104 = vector.broadcast %cst_40 : f32 to vector<16x128xf32>
    %105 = arith.select %103, %101, %104 : vector<16x128xi1>, vector<16x128xf32>
    %106 = arith.mulf %105, %105 : vector<16x128xf32>
    %cst_41 = arith.constant dense<0.000000e+00> : vector<16xf32>
    %107 = vector.multi_reduction <add>, %106, %cst_41 [1] : vector<16x128xf32> to vector<16xf32>
    %108 = vector.shape_cast %107 : vector<16xf32> to vector<16x1xf32>
    %cst_42 = arith.constant 3.125000e-02 : f32
    %109 = vector.broadcast %cst_42 : f32 to vector<16x1xf32>
    %110 = arith.mulf %108, %109 : vector<16x1xf32>
    %cst_43 = arith.constant 9.99999974E-6 : f32
    %111 = vector.broadcast %cst_43 : f32 to vector<16x1xf32>
    %112 = arith.addf %110, %111 : vector<16x1xf32>
    %113 = math.rsqrt %112 : vector<16x1xf32>
    %114 = vector.broadcast %113 : vector<16x1xf32> to vector<16x128xf32>
    %115 = arith.mulf %105, %114 : vector<16x128xf32>
    %116 = vector.broadcast %88 : vector<1x128xf32> to vector<16x128xf32>
    %117 = arith.mulf %115, %116 : vector<16x128xf32>
    %118 = vector.broadcast %89 : vector<1x128xf32> to vector<16x128xf32>
    %119 = arith.addf %117, %118 : vector<16x128xf32>
    %120 = arith.truncf %119 : vector<16x128xf32> to vector<16x128xbf16>
    %c1_44 = arith.constant 1 : index
    %c0_45 = arith.constant 0 : index
    %c0_46 = arith.constant 0 : index
    %121 = vector.load %arg4[%c1_44, %c0_45, %c0_46] : memref<2x128x128xbf16, #tpu.memory_space<vmem>>, vector<1x128x128xbf16>
    %122 = vector.shape_cast %121 : vector<1x128x128xbf16> to vector<128x128xbf16>
    %cst_47 = arith.constant dense<0.000000e+00> : vector<16x128xf32>
    %123 = tpu.matmul %120, %122, %cst_47 {dimension_numbers = #tpu.dot_dimension_numbers<[1], [0], [0], [1], [0, 0, 1, 1], [], []>} : vector<16x128xbf16>, vector<128x128xbf16>, vector<16x128xf32> -> vector<16x128xf32>
    %124 = vector.broadcast %86 : vector<1x128xf32> to vector<16x128xf32>
    %125 = arith.addf %123, %124 : vector<16x128xf32>
    %cst_48 = arith.constant 0.000000e+00 : f32
    %126 = vector.broadcast %cst_48 : f32 to vector<16x128xf32>
    %127 = arith.maximumf %125, %126 : vector<16x128xf32>
    %128 = arith.truncf %127 : vector<16x128xf32> to vector<16x128xbf16>
    %c1_49 = arith.constant 1 : index
    %c0_50 = arith.constant 0 : index
    %c0_51 = arith.constant 0 : index
    %129 = vector.load %arg5[%c1_49, %c0_50, %c0_51] : memref<2x128x128xbf16, #tpu.memory_space<vmem>>, vector<1x128x128xbf16>
    %130 = vector.shape_cast %129 : vector<1x128x128xbf16> to vector<128x128xbf16>
    %cst_52 = arith.constant dense<0.000000e+00> : vector<16x128xf32>
    %131 = tpu.matmul %128, %130, %cst_52 {dimension_numbers = #tpu.dot_dimension_numbers<[1], [0], [0], [1], [0, 0, 1, 1], [], []>} : vector<16x128xbf16>, vector<128x128xbf16>, vector<16x128xf32> -> vector<16x128xf32>
    %132 = vector.broadcast %87 : vector<1x128xf32> to vector<16x128xf32>
    %133 = arith.addf %131, %132 : vector<16x128xf32>
    %134 = arith.addf %133, %119 : vector<16x128xf32>
    %cst_53 = arith.constant dense<0.000000e+00> : vector<16xf32>
    %135 = vector.multi_reduction <add>, %134, %cst_53 [1] : vector<16x128xf32> to vector<16xf32>
    %136 = vector.shape_cast %135 : vector<16xf32> to vector<16x1xf32>
    %cst_54 = arith.constant 3.125000e-02 : f32
    %137 = vector.broadcast %cst_54 : f32 to vector<16x1xf32>
    %138 = arith.mulf %136, %137 : vector<16x1xf32>
    %139 = vector.broadcast %138 : vector<16x1xf32> to vector<16x128xf32>
    %140 = arith.subf %134, %139 : vector<16x128xf32>
    %cst_55 = arith.constant 0.000000e+00 : f32
    %141 = vector.shape_cast %2 : vector<1x128xi1> to vector<1x128xi1>
    %142 = vector.broadcast %141 : vector<1x128xi1> to vector<16x128xi1>
    %143 = vector.broadcast %cst_55 : f32 to vector<16x128xf32>
    %144 = arith.select %142, %140, %143 : vector<16x128xi1>, vector<16x128xf32>
    %145 = arith.mulf %144, %144 : vector<16x128xf32>
    %cst_56 = arith.constant dense<0.000000e+00> : vector<16xf32>
    %146 = vector.multi_reduction <add>, %145, %cst_56 [1] : vector<16x128xf32> to vector<16xf32>
    %147 = vector.shape_cast %146 : vector<16xf32> to vector<16x1xf32>
    %cst_57 = arith.constant 3.125000e-02 : f32
    %148 = vector.broadcast %cst_57 : f32 to vector<16x1xf32>
    %149 = arith.mulf %147, %148 : vector<16x1xf32>
    %cst_58 = arith.constant 9.99999974E-6 : f32
    %150 = vector.broadcast %cst_58 : f32 to vector<16x1xf32>
    %151 = arith.addf %149, %150 : vector<16x1xf32>
    %152 = math.rsqrt %151 : vector<16x1xf32>
    %153 = vector.broadcast %152 : vector<16x1xf32> to vector<16x128xf32>
    %154 = arith.mulf %144, %153 : vector<16x128xf32>
    %155 = vector.broadcast %90 : vector<1x128xf32> to vector<16x128xf32>
    %156 = arith.mulf %154, %155 : vector<16x128xf32>
    %157 = vector.broadcast %91 : vector<1x128xf32> to vector<16x128xf32>
    %158 = arith.addf %156, %157 : vector<16x128xf32>
    %c1_59 = arith.constant 1 : index
    %c0_60 = arith.constant 0 : index
    %c0_61 = arith.constant 0 : index
    %159 = vector.load %arg7[%c1_59, %c0_60, %c0_61] : memref<2x16x128xf32, #tpu.memory_space<vmem>>, vector<1x16x128xf32>
    %160 = vector.shape_cast %159 : vector<1x16x128xf32> to vector<16x128xf32>
    %161 = vector.shape_cast %158 : vector<16x128xf32> to vector<1x16x128xf32>
    tpu.vector_store %arg7[%c1_59, %c0_60, %c0_61], %161 {strides = array<i32>} : memref<2x16x128xf32, #tpu.memory_space<vmem>>, vector<1x16x128xf32>,
    return
  }
  func.func @transform_0(%arg0: i32) -> (i32, i32, i32) {
    %c0_i32 = arith.constant 0 : i32
    %c0_i32_0 = arith.constant 0 : i32
    %c0_i32_1 = arith.constant 0 : i32
    return %c0_i32, %arg0, %c0_i32_0 : i32, i32, i32
  }
  func.func @transform_1(%arg0: i32) -> (i32, i32) {
    %c0_i32 = arith.constant 0 : i32
    %c0_i32_0 = arith.constant 0 : i32
    return %arg0, %c0_i32 : i32, i32
  }
  func.func @transform_2(%arg0: i32) -> (i32, i32) {
    %c0_i32 = arith.constant 0 : i32
    %c0_i32_0 = arith.constant 0 : i32
    %c0_i32_1 = arith.constant 0 : i32
    return %c0_i32, %c0_i32_0 : i32, i32
  }
  func.func @transform_3(%arg0: i32) -> (i32, i32, i32) {
    %c0_i32 = arith.constant 0 : i32
    %c0_i32_0 = arith.constant 0 : i32
    %c0_i32_1 = arith.constant 0 : i32
    %c0_i32_2 = arith.constant 0 : i32
    return %c0_i32, %c0_i32_0, %c0_i32_1 : i32, i32, i32
  }
  func.func @transform_4(%arg0: i32) -> (i32, i32, i32) {
    %c0_i32 = arith.constant 0 : i32
    %c0_i32_0 = arith.constant 0 : i32
    %c0_i32_1 = arith.constant 0 : i32
    %c0_i32_2 = arith.constant 0 : i32
    return %c0_i32, %c0_i32_0, %c0_i32_1 : i32, i32, i32
  }
  func.func @transform_5(%arg0: i32) -> (i32, i32, i32) {
    %c0_i32 = arith.constant 0 : i32
    %c0_i32_0 = arith.constant 0 : i32
    %c0_i32_1 = arith.constant 0 : i32
    %c0_i32_2 = arith.constant 0 : i32
    return %c0_i32, %c0_i32_0, %c0_i32_1 : i32, i32, i32
  }
  func.func @transform_6(%arg0: i32) -> (i32, i32, i32) {
    %c0_i32 = arith.constant 0 : i32
    %c0_i32_0 = arith.constant 0 : i32
    %c0_i32_1 = arith.constant 0 : i32
    return %c0_i32, %arg0, %c0_i32_0 : i32, i32, i32
  }
}

module attributes {stable_mosaic.version = 11 : i64} {
  func.func @_encoder_pair_kernel(%arg0: i32, %arg1: memref<2x16x128xf32, #tpu.memory_space<vmem>>, %arg2: memref<16x128xbf16, #tpu.memory_space<vmem>>, %arg3: memref<128x256xbf16, #tpu.memory_space<vmem>>, %arg4: memref<2x128x128xbf16, #tpu.memory_space<vmem>>, %arg5: memref<2x128x128xbf16, #tpu.memory_space<vmem>>, %arg6: memref<2x8x128xf32, #tpu.memory_space<vmem>>, %arg7: memref<2x16x128xf32, #tpu.memory_space<vmem>>) attributes {dimension_semantics = [#tpu.dimension_semantics<parallel>], iteration_bounds = array<i64: 1>, scalar_prefetch = 0 : i64, scratch_operands = 0 : i64, tpu.core_type = #tpu.core_type<tc>, window_params = [{transform_indices = @transform_0, window_bounds = array<i64: 2, 16, 128>}, {transform_indices = @transform_1, window_bounds = array<i64: 16, 128>}, {pipeline_mode = #tpu.pipeline_mode<synchronous>, transform_indices = @transform_2, window_bounds = array<i64: 128, 256>}, {pipeline_mode = #tpu.pipeline_mode<synchronous>, transform_indices = @transform_3, window_bounds = array<i64: 2, 128, 128>}, {pipeline_mode = #tpu.pipeline_mode<synchronous>, transform_indices = @transform_4, window_bounds = array<i64: 2, 128, 128>}, {pipeline_mode = #tpu.pipeline_mode<synchronous>, transform_indices = @transform_5, window_bounds = array<i64: 2, 8, 128>}, {transform_indices = @transform_6, window_bounds = array<i64: 2, 16, 128>}]} {
    %0 = tpu.iota {dimensions = array<i32: 1>} : vector<1x128xi32>
    %c32_i32 = arith.constant 32 : i32
    %1 = vector.broadcast %c32_i32 : i32 to vector<1x128xi32>
    %2 = arith.cmpi slt, %0, %1 : vector<1x128xi32>
    %c0 = arith.constant 0 : index
    %c0_0 = arith.constant 0 : index
    %3 = vector.load %arg2[%c0, %c0_0] : memref<16x128xbf16, #tpu.memory_space<vmem>>, vector<16x128xbf16>
    %c0_1 = arith.constant 0 : index
    %c0_2 = arith.constant 0 : index
    %4 = vector.load %arg3[%c0_1, %c0_2] : memref<128x256xbf16, #tpu.memory_space<vmem>>, vector<128x256xbf16>
    %cst = arith.constant dense<0.000000e+00> : vector<16x256xf32>
    %5 = tpu.matmul %3, %4, %cst {dimension_numbers = #tpu.dot_dimension_numbers<[1], [0], [0], [1], [0, 0, 1, 1], [], []>} : vector<16x128xbf16>, vector<128x256xbf16>, vector<16x256xf32> -> vector<16x256xf32>
    %c0_3 = arith.constant 0 : index
    %c0_4 = arith.constant 0 : index
    %c0_5 = arith.constant 0 : index
    %6 = vector.load %arg6[%c0_3, %c0_4, %c0_5] : memref<2x8x128xf32, #tpu.memory_space<vmem>>, vector<1x8x128xf32>
    %7 = vector.shape_cast %6 : vector<1x8x128xf32> to vector<8x128xf32>
    %8 = vector.extract_strided_slice %7 {offsets = [0, 0], sizes = [1, 128], strides = [1, 1]} : vector<8x128xf32> to vector<1x128xf32>
    %9 = vector.extract_strided_slice %7 {offsets = [1, 0], sizes = [1, 128], strides = [1, 1]} : vector<8x128xf32> to vector<1x128xf32>
    %10 = vector.extract_strided_slice %7 {offsets = [2, 0], sizes = [1, 128], strides = [1, 1]} : vector<8x128xf32> to vector<1x128xf32>
    %11 = vector.extract_strided_slice %7 {offsets = [3, 0], sizes = [1, 128], strides = [1, 1]} : vector<8x128xf32> to vector<1x128xf32>
    %12 = vector.extract_strided_slice %7 {offsets = [4, 0], sizes = [1, 128], strides = [1, 1]} : vector<8x128xf32> to vector<1x128xf32>
    %13 = vector.extract_strided_slice %7 {offsets = [5, 0], sizes = [1, 128], strides = [1, 1]} : vector<8x128xf32> to vector<1x128xf32>
    %c0_6 = arith.constant 0 : index
    %c0_7 = arith.constant 0 : index
    %c0_8 = arith.constant 0 : index
    %14 = vector.load %arg1[%c0_6, %c0_7, %c0_8] : memref<2x16x128xf32, #tpu.memory_space<vmem>>, vector<1x16x128xf32>
    %15 = vector.shape_cast %14 : vector<1x16x128xf32> to vector<16x128xf32>
    %16 = vector.extract_strided_slice %5 {offsets = [0, 0], sizes = [16, 128], strides = [1, 1]} : vector<16x256xf32> to vector<16x128xf32>
    %17 = arith.addf %15, %16 : vector<16x128xf32>
    %cst_9 = arith.constant dense<0.000000e+00> : vector<16xf32>
    %18 = vector.multi_reduction <add>, %17, %cst_9 [1] : vector<16x128xf32> to vector<16xf32>
    %19 = vector.shape_cast %18 : vector<16xf32> to vector<16x1xf32>
    %cst_10 = arith.constant 3.125000e-02 : f32
    %20 = vector.broadcast %cst_10 : f32 to vector<16x1xf32>
    %21 = arith.mulf %19, %20 : vector<16x1xf32>
    %22 = vector.broadcast %21 : vector<16x1xf32> to vector<16x128xf32>
    %23 = arith.subf %17, %22 : vector<16x128xf32>
    %cst_11 = arith.constant 0.000000e+00 : f32
    %24 = vector.shape_cast %2 : vector<1x128xi1> to vector<1x128xi1>
    %25 = vector.broadcast %24 : vector<1x128xi1> to vector<16x128xi1>
    %26 = vector.broadcast %cst_11 : f32 to vector<16x128xf32>
    %27 = arith.select %25, %23, %26 : vector<16x128xi1>, vector<16x128xf32>
    %28 = arith.mulf %27, %27 : vector<16x128xf32>
    %cst_12 = arith.constant dense<0.000000e+00> : vector<16xf32>
    %29 = vector.multi_reduction <add>, %28, %cst_12 [1] : vector<16x128xf32> to vector<16xf32>
    %30 = vector.shape_cast %29 : vector<16xf32> to vector<16x1xf32>
    %cst_13 = arith.constant 3.125000e-02 : f32
    %31 = vector.broadcast %cst_13 : f32 to vector<16x1xf32>
    %32 = arith.mulf %30, %31 : vector<16x1xf32>
    %cst_14 = arith.constant 9.99999974E-6 : f32
    %33 = vector.broadcast %cst_14 : f32 to vector<16x1xf32>
    %34 = arith.addf %32, %33 : vector<16x1xf32>
    %35 = math.rsqrt %34 : vector<16x1xf32>
    %36 = vector.broadcast %35 : vector<16x1xf32> to vector<16x128xf32>
    %37 = arith.mulf %27, %36 : vector<16x128xf32>
    %38 = vector.broadcast %10 : vector<1x128xf32> to vector<16x128xf32>
    %39 = arith.mulf %37, %38 : vector<16x128xf32>
    %40 = vector.broadcast %11 : vector<1x128xf32> to vector<16x128xf32>
    %41 = arith.addf %39, %40 : vector<16x128xf32>
    %42 = arith.truncf %41 : vector<16x128xf32> to vector<16x128xbf16>
    %c0_15 = arith.constant 0 : index
    %c0_16 = arith.constant 0 : index
    %c0_17 = arith.constant 0 : index
    %43 = vector.load %arg4[%c0_15, %c0_16, %c0_17] : memref<2x128x128xbf16, #tpu.memory_space<vmem>>, vector<1x128x128xbf16>
    %44 = vector.shape_cast %43 : vector<1x128x128xbf16> to vector<128x128xbf16>
    %cst_18 = arith.constant dense<0.000000e+00> : vector<16x128xf32>
    %45 = tpu.matmul %42, %44, %cst_18 {dimension_numbers = #tpu.dot_dimension_numbers<[1], [0], [0], [1], [0, 0, 1, 1], [], []>} : vector<16x128xbf16>, vector<128x128xbf16>, vector<16x128xf32> -> vector<16x128xf32>
    %46 = vector.broadcast %8 : vector<1x128xf32> to vector<16x128xf32>
    %47 = arith.addf %45, %46 : vector<16x128xf32>
    %cst_19 = arith.constant 0.000000e+00 : f32
    %48 = vector.broadcast %cst_19 : f32 to vector<16x128xf32>
    %49 = arith.maximumf %47, %48 : vector<16x128xf32>
    %50 = arith.truncf %49 : vector<16x128xf32> to vector<16x128xbf16>
    %c0_20 = arith.constant 0 : index
    %c0_21 = arith.constant 0 : index
    %c0_22 = arith.constant 0 : index
    %51 = vector.load %arg5[%c0_20, %c0_21, %c0_22] : memref<2x128x128xbf16, #tpu.memory_space<vmem>>, vector<1x128x128xbf16>
    %52 = vector.shape_cast %51 : vector<1x128x128xbf16> to vector<128x128xbf16>
    %cst_23 = arith.constant dense<0.000000e+00> : vector<16x128xf32>
    %53 = tpu.matmul %50, %52, %cst_23 {dimension_numbers = #tpu.dot_dimension_numbers<[1], [0], [0], [1], [0, 0, 1, 1], [], []>} : vector<16x128xbf16>, vector<128x128xbf16>, vector<16x128xf32> -> vector<16x128xf32>
    %54 = vector.broadcast %9 : vector<1x128xf32> to vector<16x128xf32>
    %55 = arith.addf %53, %54 : vector<16x128xf32>
    %56 = arith.addf %55, %41 : vector<16x128xf32>
    %cst_24 = arith.constant dense<0.000000e+00> : vector<16xf32>
    %57 = vector.multi_reduction <add>, %56, %cst_24 [1] : vector<16x128xf32> to vector<16xf32>
    %58 = vector.shape_cast %57 : vector<16xf32> to vector<16x1xf32>
    %cst_25 = arith.constant 3.125000e-02 : f32
    %59 = vector.broadcast %cst_25 : f32 to vector<16x1xf32>
    %60 = arith.mulf %58, %59 : vector<16x1xf32>
    %61 = vector.broadcast %60 : vector<16x1xf32> to vector<16x128xf32>
    %62 = arith.subf %56, %61 : vector<16x128xf32>
    %cst_26 = arith.constant 0.000000e+00 : f32
    %63 = vector.shape_cast %2 : vector<1x128xi1> to vector<1x128xi1>
    %64 = vector.broadcast %63 : vector<1x128xi1> to vector<16x128xi1>
    %65 = vector.broadcast %cst_26 : f32 to vector<16x128xf32>
    %66 = arith.select %64, %62, %65 : vector<16x128xi1>, vector<16x128xf32>
    %67 = arith.mulf %66, %66 : vector<16x128xf32>
    %cst_27 = arith.constant dense<0.000000e+00> : vector<16xf32>
    %68 = vector.multi_reduction <add>, %67, %cst_27 [1] : vector<16x128xf32> to vector<16xf32>
    %69 = vector.shape_cast %68 : vector<16xf32> to vector<16x1xf32>
    %cst_28 = arith.constant 3.125000e-02 : f32
    %70 = vector.broadcast %cst_28 : f32 to vector<16x1xf32>
    %71 = arith.mulf %69, %70 : vector<16x1xf32>
    %cst_29 = arith.constant 9.99999974E-6 : f32
    %72 = vector.broadcast %cst_29 : f32 to vector<16x1xf32>
    %73 = arith.addf %71, %72 : vector<16x1xf32>
    %74 = math.rsqrt %73 : vector<16x1xf32>
    %75 = vector.broadcast %74 : vector<16x1xf32> to vector<16x128xf32>
    %76 = arith.mulf %66, %75 : vector<16x128xf32>
    %77 = vector.broadcast %12 : vector<1x128xf32> to vector<16x128xf32>
    %78 = arith.mulf %76, %77 : vector<16x128xf32>
    %79 = vector.broadcast %13 : vector<1x128xf32> to vector<16x128xf32>
    %80 = arith.addf %78, %79 : vector<16x128xf32>
    %c0_30 = arith.constant 0 : index
    %c0_31 = arith.constant 0 : index
    %c0_32 = arith.constant 0 : index
    %81 = vector.load %arg7[%c0_30, %c0_31, %c0_32] : memref<2x16x128xf32, #tpu.memory_space<vmem>>, vector<1x16x128xf32>
    %82 = vector.shape_cast %81 : vector<1x16x128xf32> to vector<16x128xf32>
    %83 = vector.shape_cast %80 : vector<16x128xf32> to vector<1x16x128xf32>
    tpu.vector_store %arg7[%c0_30, %c0_31, %c0_32], %83 {strides = array<i32>} : memref<2x16x128xf32, #tpu.memory_space<vmem>>, vector<1x16x128xf32>,
    %c1 = arith.constant 1 : index
    %c0_33 = arith.constant 0 : index
    %c0_34 = arith.constant 0 : index
    %84 = vector.load %arg6[%c1, %c0_33, %c0_34] : memref<2x8x128xf32, #tpu.memory_space<vmem>>, vector<1x8x128xf32>
    %85 = vector.shape_cast %84 : vector<1x8x128xf32> to vector<8x128xf32>
    %86 = vector.extract_strided_slice %85 {offsets = [0, 0], sizes = [1, 128], strides = [1, 1]} : vector<8x128xf32> to vector<1x128xf32>
    %87 = vector.extract_strided_slice %85 {offsets = [1, 0], sizes = [1, 128], strides = [1, 1]} : vector<8x128xf32> to vector<1x128xf32>
    %88 = vector.extract_strided_slice %85 {offsets = [2, 0], sizes = [1, 128], strides = [1, 1]} : vector<8x128xf32> to vector<1x128xf32>
    %89 = vector.extract_strided_slice %85 {offsets = [3, 0], sizes = [1, 128], strides = [1, 1]} : vector<8x128xf32> to vector<1x128xf32>
    %90 = vector.extract_strided_slice %85 {offsets = [4, 0], sizes = [1, 128], strides = [1, 1]} : vector<8x128xf32> to vector<1x128xf32>
    %91 = vector.extract_strided_slice %85 {offsets = [5, 0], sizes = [1, 128], strides = [1, 1]} : vector<8x128xf32> to vector<1x128xf32>
    %c1_35 = arith.constant 1 : index
    %c0_36 = arith.constant 0 : index
    %c0_37 = arith.constant 0 : index
    %92 = vector.load %arg1[%c1_35, %c0_36, %c0_37] : memref<2x16x128xf32, #tpu.memory_space<vmem>>, vector<1x16x128xf32>
    %93 = vector.shape_cast %92 : vector<1x16x128xf32> to vector<16x128xf32>
    %94 = vector.extract_strided_slice %5 {offsets = [0, 128], sizes = [16, 128], strides = [1, 1]} : vector<16x256xf32> to vector<16x128xf32>
    %95 = arith.addf %93, %94 : vector<16x128xf32>
    %cst_38 = arith.constant dense<0.000000e+00> : vector<16xf32>
    %96 = vector.multi_reduction <add>, %95, %cst_38 [1] : vector<16x128xf32> to vector<16xf32>
    %97 = vector.shape_cast %96 : vector<16xf32> to vector<16x1xf32>
    %cst_39 = arith.constant 3.125000e-02 : f32
    %98 = vector.broadcast %cst_39 : f32 to vector<16x1xf32>
    %99 = arith.mulf %97, %98 : vector<16x1xf32>
    %100 = vector.broadcast %99 : vector<16x1xf32> to vector<16x128xf32>
    %101 = arith.subf %95, %100 : vector<16x128xf32>
    %cst_40 = arith.constant 0.000000e+00 : f32
    %102 = vector.shape_cast %2 : vector<1x128xi1> to vector<1x128xi1>
    %103 = vector.broadcast %102 : vector<1x128xi1> to vector<16x128xi1>
    %104 = vector.broadcast %cst_40 : f32 to vector<16x128xf32>
    %105 = arith.select %103, %101, %104 : vector<16x128xi1>, vector<16x128xf32>
    %106 = arith.mulf %105, %105 : vector<16x128xf32>
    %cst_41 = arith.constant dense<0.000000e+00> : vector<16xf32>
    %107 = vector.multi_reduction <add>, %106, %cst_41 [1] : vector<16x128xf32> to vector<16xf32>
    %108 = vector.shape_cast %107 : vector<16xf32> to vector<16x1xf32>
    %cst_42 = arith.constant 3.125000e-02 : f32
    %109 = vector.broadcast %cst_42 : f32 to vector<16x1xf32>
    %110 = arith.mulf %108, %109 : vector<16x1xf32>
    %cst_43 = arith.constant 9.99999974E-6 : f32
    %111 = vector.broadcast %cst_43 : f32 to vector<16x1xf32>
    %112 = arith.addf %110, %111 : vector<16x1xf32>
    %113 = math.rsqrt %112 : vector<16x1xf32>
    %114 = vector.broadcast %113 : vector<16x1xf32> to vector<16x128xf32>
    %115 = arith.mulf %105, %114 : vector<16x128xf32>
    %116 = vector.broadcast %88 : vector<1x128xf32> to vector<16x128xf32>
    %117 = arith.mulf %115, %116 : vector<16x128xf32>
    %118 = vector.broadcast %89 : vector<1x128xf32> to vector<16x128xf32>
    %119 = arith.addf %117, %118 : vector<16x128xf32>
    %120 = arith.truncf %119 : vector<16x128xf32> to vector<16x128xbf16>
    %c1_44 = arith.constant 1 : index
    %c0_45 = arith.constant 0 : index
    %c0_46 = arith.constant 0 : index
    %121 = vector.load %arg4[%c1_44, %c0_45, %c0_46] : memref<2x128x128xbf16, #tpu.memory_space<vmem>>, vector<1x128x128xbf16>
    %122 = vector.shape_cast %121 : vector<1x128x128xbf16> to vector<128x128xbf16>
    %cst_47 = arith.constant dense<0.000000e+00> : vector<16x128xf32>
    %123 = tpu.matmul %120, %122, %cst_47 {dimension_numbers = #tpu.dot_dimension_numbers<[1], [0], [0], [1], [0, 0, 1, 1], [], []>} : vector<16x128xbf16>, vector<128x128xbf16>, vector<16x128xf32> -> vector<16x128xf32>
    %124 = vector.broadcast %86 : vector<1x128xf32> to vector<16x128xf32>
    %125 = arith.addf %123, %124 : vector<16x128xf32>
    %cst_48 = arith.constant 0.000000e+00 : f32
    %126 = vector.broadcast %cst_48 : f32 to vector<16x128xf32>
    %127 = arith.maximumf %125, %126 : vector<16x128xf32>
    %128 = arith.truncf %127 : vector<16x128xf32> to vector<16x128xbf16>
    %c1_49 = arith.constant 1 : index
    %c0_50 = arith.constant 0 : index
    %c0_51 = arith.constant 0 : index
    %129 = vector.load %arg5[%c1_49, %c0_50, %c0_51] : memref<2x128x128xbf16, #tpu.memory_space<vmem>>, vector<1x128x128xbf16>
    %130 = vector.shape_cast %129 : vector<1x128x128xbf16> to vector<128x128xbf16>
    %cst_52 = arith.constant dense<0.000000e+00> : vector<16x128xf32>
    %131 = tpu.matmul %128, %130, %cst_52 {dimension_numbers = #tpu.dot_dimension_numbers<[1], [0], [0], [1], [0, 0, 1, 1], [], []>} : vector<16x128xbf16>, vector<128x128xbf16>, vector<16x128xf32> -> vector<16x128xf32>
    %132 = vector.broadcast %87 : vector<1x128xf32> to vector<16x128xf32>
    %133 = arith.addf %131, %132 : vector<16x128xf32>
    %134 = arith.addf %133, %119 : vector<16x128xf32>
    %cst_53 = arith.constant dense<0.000000e+00> : vector<16xf32>
    %135 = vector.multi_reduction <add>, %134, %cst_53 [1] : vector<16x128xf32> to vector<16xf32>
    %136 = vector.shape_cast %135 : vector<16xf32> to vector<16x1xf32>
    %cst_54 = arith.constant 3.125000e-02 : f32
    %137 = vector.broadcast %cst_54 : f32 to vector<16x1xf32>
    %138 = arith.mulf %136, %137 : vector<16x1xf32>
    %139 = vector.broadcast %138 : vector<16x1xf32> to vector<16x128xf32>
    %140 = arith.subf %134, %139 : vector<16x128xf32>
    %cst_55 = arith.constant 0.000000e+00 : f32
    %141 = vector.shape_cast %2 : vector<1x128xi1> to vector<1x128xi1>
    %142 = vector.broadcast %141 : vector<1x128xi1> to vector<16x128xi1>
    %143 = vector.broadcast %cst_55 : f32 to vector<16x128xf32>
    %144 = arith.select %142, %140, %143 : vector<16x128xi1>, vector<16x128xf32>
    %145 = arith.mulf %144, %144 : vector<16x128xf32>
    %cst_56 = arith.constant dense<0.000000e+00> : vector<16xf32>
    %146 = vector.multi_reduction <add>, %145, %cst_56 [1] : vector<16x128xf32> to vector<16xf32>
    %147 = vector.shape_cast %146 : vector<16xf32> to vector<16x1xf32>
    %cst_57 = arith.constant 3.125000e-02 : f32
    %148 = vector.broadcast %cst_57 : f32 to vector<16x1xf32>
    %149 = arith.mulf %147, %148 : vector<16x1xf32>
    %cst_58 = arith.constant 9.99999974E-6 : f32
    %150 = vector.broadcast %cst_58 : f32 to vector<16x1xf32>
    %151 = arith.addf %149, %150 : vector<16x1xf32>
    %152 = math.rsqrt %151 : vector<16x1xf32>
    %153 = vector.broadcast %152 : vector<16x1xf32> to vector<16x128xf32>
    %154 = arith.mulf %144, %153 : vector<16x128xf32>
    %155 = vector.broadcast %90 : vector<1x128xf32> to vector<16x128xf32>
    %156 = arith.mulf %154, %155 : vector<16x128xf32>
    %157 = vector.broadcast %91 : vector<1x128xf32> to vector<16x128xf32>
    %158 = arith.addf %156, %157 : vector<16x128xf32>
    %c1_59 = arith.constant 1 : index
    %c0_60 = arith.constant 0 : index
    %c0_61 = arith.constant 0 : index
    %159 = vector.load %arg7[%c1_59, %c0_60, %c0_61] : memref<2x16x128xf32, #tpu.memory_space<vmem>>, vector<1x16x128xf32>
    %160 = vector.shape_cast %159 : vector<1x16x128xf32> to vector<16x128xf32>
    %161 = vector.shape_cast %158 : vector<16x128xf32> to vector<1x16x128xf32>
    tpu.vector_store %arg7[%c1_59, %c0_60, %c0_61], %161 {strides = array<i32>} : memref<2x16x128xf32, #tpu.memory_space<vmem>>, vector<1x16x128xf32>,
    return
  }
  func.func @transform_0(%arg0: i32) -> (i32, i32, i32) {
    %c0_i32 = arith.constant 0 : i32
    %c0_i32_0 = arith.constant 0 : i32
    %c0_i32_1 = arith.constant 0 : i32
    return %c0_i32, %arg0, %c0_i32_0 : i32, i32, i32
  }
  func.func @transform_1(%arg0: i32) -> (i32, i32) {
    %c0_i32 = arith.constant 0 : i32
    %c0_i32_0 = arith.constant 0 : i32
    return %arg0, %c0_i32 : i32, i32
  }
  func.func @transform_2(%arg0: i32) -> (i32, i32) {
    %c0_i32 = arith.constant 0 : i32
    %c0_i32_0 = arith.constant 0 : i32
    %c0_i32_1 = arith.constant 0 : i32
    return %c0_i32, %c0_i32_0 : i32, i32
  }
  func.func @transform_3(%arg0: i32) -> (i32, i32, i32) {
    %c0_i32 = arith.constant 0 : i32
    %c0_i32_0 = arith.constant 0 : i32
    %c0_i32_1 = arith.constant 0 : i32
    %c0_i32_2 = arith.constant 0 : i32
    return %c0_i32, %c0_i32_0, %c0_i32_1 : i32, i32, i32
  }
  func.func @transform_4(%arg0: i32) -> (i32, i32, i32) {
    %c0_i32 = arith.constant 0 : i32
    %c0_i32_0 = arith.constant 0 : i32
    %c0_i32_1 = arith.constant 0 : i32
    %c0_i32_2 = arith.constant 0 : i32
    return %c0_i32, %c0_i32_0, %c0_i32_1 : i32, i32, i32
  }
  func.func @transform_5(%arg0: i32) -> (i32, i32, i32) {
    %c0_i32 = arith.constant 0 : i32
    %c0_i32_0 = arith.constant 0 : i32
    %c0_i32_1 = arith.constant 0 : i32
    %c0_i32_2 = arith.constant 0 : i32
    return %c0_i32, %c0_i32_0, %c0_i32_1 : i32, i32, i32
  }
  func.func @transform_6(%arg0: i32) -> (i32, i32, i32) {
    %c0_i32 = arith.constant 0 : i32
    %c0_i32_0 = arith.constant 0 : i32
    %c0_i32_1 = arith.constant 0 : i32
    return %c0_i32, %arg0, %c0_i32_0 : i32, i32, i32
  }
}

</mosaic_0001>

<llo_original>
// kernel: tpu_custom_call.1
$region0: #{tpu_custom_call.1}
  #allocation0 [shape = 'u32[]', space=smem, size = 0x4, offset = 0x4, fixed_abs, tag = 'smem constant byte address 0x4 - core index']
  #allocation1 [shape = 'u32[144,128]{1,0:T(1,128)}', space=vmem, size = 0x12000, scoped, tag = 'internal scratch']
  %s0 = inlined_call_operand.hbm [shape: f32[2,16,128], index: 0, kind: input, shape index: {}]
  %s1 = inlined_call_operand.hbm [shape: bf16[16,128], index: 1, kind: input, shape index: {}]
  %s2 = inlined_call_operand.hbm [shape: bf16[128,256], index: 2, kind: input, shape index: {}]
  %s3 = inlined_call_operand.hbm [shape: bf16[2,128,128], index: 3, kind: input, shape index: {}]
  %s4 = inlined_call_operand.hbm [shape: bf16[2,128,128], index: 4, kind: input, shape index: {}]
  %s5 = inlined_call_operand.vmem [shape: f32[2,8,128], index: 5, kind: input, shape index: {}]
  %s6 = inlined_call_operand.hbm [shape: f32[2,16,128], index: 6, kind: output, shape index: {}]
  %s7 = sld [smem:[#allocation0]]
  $region54: #{tpu_custom_call.1} parent=0
    _
  %s9 = ssub.s32 1, %s7
  %s10 = scalar_select 0, %s9, %s7
  $region1: #{tpu_custom_call.1} parent=0
    #allocation2 [shape = 'u8[16384]{0}', space=vmem, size = 0x4000, scoped, tag = 'input window, operand 0, single buffered']
    #allocation3 [shape = 's32[1]{0}', space=sflag, size = 0x4, scoped, tag = 'scoped memory for tpu_custom_call.1']
    #allocation4 [shape = 's32[1]{0}', space=sflag, size = 0x4, scoped, tag = 'scoped memory for tpu_custom_call.1']
    #allocation5 [shape = 'u8[4096]{0}', space=vmem, size = 0x1000, scoped, tag = 'input window, operand 1, single buffered']
    #allocation6 [shape = 's32[1]{0}', space=sflag, size = 0x4, scoped, tag = 'scoped memory for tpu_custom_call.1']
    #allocation7 [shape = 'u8[65536]{0}', space=vmem, size = 0x10000, scoped, tag = 'input window, operand 2, single buffered']
    #allocation8 [shape = 'u8[65536]{0}', space=vmem, size = 0x10000, scoped, tag = 'input window, operand 3, single buffered']
    #allocation9 [shape = 's32[1]{0}', space=sflag, size = 0x4, scoped, tag = 'scoped memory for tpu_custom_call.1']
    #allocation10 [shape = 'u8[65536]{0}', space=vmem, size = 0x10000, scoped, tag = 'input window, operand 4, single buffered']
    #allocation11 [shape = 'u8[16384]{0}', space=vmem, size = 0x4000, scoped, tag = 'output window, operand 0, single buffered']
    %11 = vsyncpa [#allocation3], 0
    %12 = vsyncpa [#allocation6], 0
    %13 = vsyncpa [#allocation9], 0
    %14 = vsyncpa [#allocation4], 0
    // Predicated region
    $region2: #{tpu_custom_call.1} parent=1 // pred_check
      _
    $region3: #{tpu_custom_call.1} parent=1 // pred_check_branch
      %16 = sbr.rel (0) target = $region5
    $region4: #{tpu_custom_call.1} parent=1 // pred_region
      %s18 = ssub.s32 512, 512
      %19 = vsyncadd [#allocation3], %s18
      %s20 = sshll.u32 [#allocation2], 4
      %s21 = int_to_ptr.vmem [resolvable:$true] %s20
      %26 = dma.hbm_to_vmem [thread:$0]  %s0, 512, %s21, [#allocation3], 128, 128, 8
    $region5: #{tpu_custom_call.1} parent=1 // pred_fallthru
      _
    // Predicated region
    $region6: #{tpu_custom_call.1} parent=1 // pred_check
      _
    $region7: #{tpu_custom_call.1} parent=1 // pred_check_branch
      %28 = sbr.rel (0) target = $region9
    $region8: #{tpu_custom_call.1} parent=1 // pred_region
      %s30 = ssub.s32 128, 128
      %31 = vsyncadd [#allocation6], %s30
      %s32 = sshll.u32 [#allocation5], 4
      %s33 = int_to_ptr.vmem [resolvable:$true] %s32
      %38 = dma.hbm_to_vmem [thread:$0]  %s1, 128, %s33, [#allocation6], 64, 64, 4
    $region9: #{tpu_custom_call.1} parent=1 // pred_fallthru
      _
    // Predicated region
    $region10: #{tpu_custom_call.1} parent=1 // pred_check
      _
    $region11: #{tpu_custom_call.1} parent=1 // pred_check_branch
      %40 = sbr.rel (0) target = $region13
    $region12: #{tpu_custom_call.1} parent=1 // pred_region
      %s42 = ssub.s32 2048, 2048
      %43 = vsyncadd [#allocation6], %s42
      %s44 = sshll.u32 [#allocation7], 4
      %s45 = int_to_ptr.vmem [resolvable:$true] %s44
      %50 = dma.hbm_to_vmem [thread:$0]  %s2, 2048, %s45, [#allocation6], 128, 128, 8
    $region13: #{tpu_custom_call.1} parent=1 // pred_fallthru
      _
    // Predicated region
    $region14: #{tpu_custom_call.1} parent=1 // pred_check
      _
    $region15: #{tpu_custom_call.1} parent=1 // pred_check_branch
      %52 = sbr.rel (0) target = $region17
    $region16: #{tpu_custom_call.1} parent=1 // pred_region
      %s54 = ssub.s32 2048, 2048
      %55 = vsyncadd [#allocation9], %s54
      %s56 = sshll.u32 [#allocation8], 4
      %s57 = int_to_ptr.vmem [resolvable:$true] %s56
      %62 = dma.hbm_to_vmem [thread:$0]  %s3, 2048, %s57, [#allocation9], 64, 64, 4
    $region17: #{tpu_custom_call.1} parent=1 // pred_fallthru
      _
    // Predicated region
    $region18: #{tpu_custom_call.1} parent=1 // pred_check
      _
    $region19: #{tpu_custom_call.1} parent=1 // pred_check_branch
      %64 = sbr.rel (0) target = $region21
    $region20: #{tpu_custom_call.1} parent=1 // pred_region
      %s66 = ssub.s32 2048, 2048
      %67 = vsyncadd [#allocation9], %s66
      %s68 = sshll.u32 [#allocation10], 4
      %s69 = int_to_ptr.vmem [resolvable:$true] %s68
      %74 = dma.hbm_to_vmem [thread:$0]  %s4, 2048, %s69, [#allocation9], 64, 64, 4
    $region21: #{tpu_custom_call.1} parent=1 // pred_fallthru
      _
    // Predicated region
    $region22: #{tpu_custom_call.1} parent=1 // pred_check
      _
    $region23: #{tpu_custom_call.1} parent=1 // pred_check_branch
      %76 = sbr.rel (0) target = $region25
    $region24: #{tpu_custom_call.1} parent=1 // pred_region
      _
    $region25: #{tpu_custom_call.1} parent=1 // pred_fallthru
      _
    // Predicated region
    $region26: #{tpu_custom_call.1} parent=1 // pred_check
      _
    $region27: #{tpu_custom_call.1} parent=1 // pred_check_branch
      %78 = sbr.rel (0) target = $region29
    $region28: #{tpu_custom_call.1} parent=1 // pred_region
      %79 = dma.done [#allocation3], 512
    $region29: #{tpu_custom_call.1} parent=1 // pred_fallthru
      _
    // Predicated region
    $region30: #{tpu_custom_call.1} parent=1 // pred_check
      _
    $region31: #{tpu_custom_call.1} parent=1 // pred_check_branch
      %81 = sbr.rel (0) target = $region33
    $region32: #{tpu_custom_call.1} parent=1 // pred_region
      %82 = dma.done [#allocation6], 128
    $region33: #{tpu_custom_call.1} parent=1 // pred_fallthru
      _
    // Predicated region
    $region34: #{tpu_custom_call.1} parent=1 // pred_check
      _
    $region35: #{tpu_custom_call.1} parent=1 // pred_check_branch
      %84 = sbr.rel (0) target = $region37
    $region36: #{tpu_custom_call.1} parent=1 // pred_region
      %85 = dma.done [#allocation6], 2048
    $region37: #{tpu_custom_call.1} parent=1 // pred_fallthru
      _
    // Predicated region
    $region38: #{tpu_custom_call.1} parent=1 // pred_check
      _
    $region39: #{tpu_custom_call.1} parent=1 // pred_check_branch
      %87 = sbr.rel (0) target = $region41
    $region40: #{tpu_custom_call.1} parent=1 // pred_region
      %88 = dma.done [#allocation9], 2048
    $region41: #{tpu_custom_call.1} parent=1 // pred_fallthru
      _
    // Predicated region
    $region42: #{tpu_custom_call.1} parent=1 // pred_check
      _
    $region43: #{tpu_custom_call.1} parent=1 // pred_check_branch
      %90 = sbr.rel (0) target = $region45
    $region44: #{tpu_custom_call.1} parent=1 // pred_region
      %91 = dma.done [#allocation9], 2048
    $region45: #{tpu_custom_call.1} parent=1 // pred_fallthru
      _
    %v93 = vlaneseq
    %v94 = vand.u32 %v93, 127
    %vm95 = vcmp.lt.s32.totalorder %v94, 32
    %v96 = vld [vmem:[#allocation5] sm:$0xf]
    %v97 = vld [vmem:[#allocation5 + $0x4] sm:$0xf]
    %v98 = vld [vmem:[#allocation7] sm:$0xff]
    %v99 = vld [vmem:[#allocation7 + $0x8] sm:$0xff]
    %v100 = vld [vmem:[#allocation7 + $0x10] sm:$0xff]
    %v101 = vld [vmem:[#allocation7 + $0x18] sm:$0xff]
    %v102 = vld [vmem:[#allocation7 + $0x20] sm:$0xff]
    %v103 = vld [vmem:[#allocation7 + $0x28] sm:$0xff]
    %v104 = vld [vmem:[#allocation7 + $0x30] sm:$0xff]
    %v105 = vld [vmem:[#allocation7 + $0x38] sm:$0xff]
    %v106 = vld [vmem:[#allocation7 + $0x40] sm:$0xff]
    %v107 = vld [vmem:[#allocation7 + $0x48] sm:$0xff]
    %v108 = vld [vmem:[#allocation7 + $0x50] sm:$0xff]
    %v109 = vld [vmem:[#allocation7 + $0x58] sm:$0xff]
    %v110 = vld [vmem:[#allocation7 + $0x60] sm:$0xff]
    %v111 = vld [vmem:[#allocation7 + $0x68] sm:$0xff]
    %v112 = vld [vmem:[#allocation7 + $0x70] sm:$0xff]
    %v113 = vld [vmem:[#allocation7 + $0x78] sm:$0xff]
    %v116 = vunpack.c.l.b16 %v96
    %v117 = vunpack.c.l.b16 %v97
    %v118 = vpack.c.b16 %v117, %v116
    %v136 = vunpack.c.l.b16 %v98
    %v137 = vunpack.c.h.b16 %v98
    %v138 = vunpack.c.l.b16 %v99
    %v139 = vunpack.c.h.b16 %v99
    %v140 = vunpack.c.l.b16 %v100
    %v141 = vunpack.c.h.b16 %v100
    %v142 = vunpack.c.l.b16 %v101
    %v143 = vunpack.c.h.b16 %v101
    %v144 = vunpack.c.l.b16 %v102
    %v145 = vunpack.c.h.b16 %v102
    %v146 = vunpack.c.l.b16 %v103
    %v147 = vunpack.c.h.b16 %v103
    %v148 = vunpack.c.l.b16 %v104
    %v149 = vunpack.c.h.b16 %v104
    %v150 = vunpack.c.l.b16 %v105
    %v151 = vunpack.c.h.b16 %v105
    %v152 = vunpack.c.l.b16 %v106
    %v153 = vunpack.c.h.b16 %v106
    %v154 = vunpack.c.l.b16 %v107
    %v155 = vunpack.c.h.b16 %v107
    %v156 = vunpack.c.l.b16 %v108
    %v157 = vunpack.c.h.b16 %v108
    %v158 = vunpack.c.l.b16 %v109
    %v159 = vunpack.c.h.b16 %v109
    %v160 = vunpack.c.l.b16 %v110
    %v161 = vunpack.c.h.b16 %v110
    %v162 = vunpack.c.l.b16 %v111
    %v163 = vunpack.c.h.b16 %v111
    %v164 = vunpack.c.l.b16 %v112
    %v165 = vunpack.c.h.b16 %v112
    %v166 = vunpack.c.l.b16 %v113
    %v167 = vunpack.c.h.b16 %v113
    %v168 = vpack.c.b16 %v138, %v136
    %v169 = vpack.c.b16 %v139, %v137
    %v170 = vpack.c.b16 %v142, %v140
    %v171 = vpack.c.b16 %v143, %v141
    %v172 = vpack.c.b16 %v146, %v144
    %v173 = vpack.c.b16 %v147, %v145
    %v174 = vpack.c.b16 %v150, %v148
    %v175 = vpack.c.b16 %v151, %v149
    %v176 = vpack.c.b16 %v154, %v152
    %v177 = vpack.c.b16 %v155, %v153
    %v178 = vpack.c.b16 %v158, %v156
    %v179 = vpack.c.b16 %v159, %v157
    %v180 = vpack.c.b16 %v162, %v160
    %v181 = vpack.c.b16 %v163, %v161
    %v182 = vpack.c.b16 %v166, %v164
    %v183 = vpack.c.b16 %v167, %v165
    %200 = vmatprep.subr.bf16.mxu0 %v169
    %201 = vmatpush1.bf16.msra.mxu0 %v168
    %202 = vmatprep.subr.bf16.mxu0 %v171
    %203 = vmatpush1.bf16.msra.mxu0 %v170
    %204 = vmatprep.subr.bf16.mxu0 %v173
    %205 = vmatpush1.bf16.msra.mxu0 %v172
    %206 = vmatprep.subr.bf16.mxu0 %v175
    %207 = vmatpush1.bf16.msra.mxu0 %v174
    %208 = vmatprep.subr.bf16.mxu0 %v177
    %209 = vmatpush1.bf16.msra.mxu0 %v176
    %210 = vmatprep.subr.bf16.mxu0 %v179
    %211 = vmatpush1.bf16.msra.mxu0 %v178
    %212 = vmatprep.subr.bf16.mxu0 %v181
    %213 = vmatpush1.bf16.msra.mxu0 %v180
    %214 = vmatprep.subr.bf16.mxu0 %v183
    %215 = vmatpush1.bf16.msra.mxu0 %v182
    %216 = vmatprep.subr.bf16.mxu0 0
    %217 = vmatpush1.bf16.msra.mxu0 0
    %218 = vmatprep.subr.bf16.mxu0 0
    %219 = vmatpush1.bf16.msra.mxu0 0
    %220 = vmatprep.subr.bf16.mxu0 0
    %221 = vmatpush1.bf16.msra.mxu0 0
    %222 = vmatprep.subr.bf16.mxu0 0
    %223 = vmatpush1.bf16.msra.mxu0 0
    %224 = vmatprep.subr.bf16.mxu0 0
    %225 = vmatpush1.bf16.msra.mxu0 0
    %226 = vmatprep.subr.bf16.mxu0 0
    %227 = vmatpush1.bf16.msra.mxu0 0
    %228 = vmatprep.subr.bf16.mxu0 0
    %229 = vmatpush1.bf16.msra.mxu0 0
    %230 = vmatprep.subr.bf16.mxu0 0
    %231 = vmatpush1.bf16.msra.mxu0 0
    %232 = vmatprep.mubr.bf16.mxu0 0
    %233 = vmatmul.mubr.bf16.gmra.mrb[0].mxu0 %v118
    %v234 = vpop.f32.mrb[0].mxu0
    %v235 = vadd.f32 0.0, %v234
    %v236 = vpop.f32.mrb[0].mxu0
    %v237 = vadd.f32 0.0, %v236
    %v238 = vpop.f32.mrb[0].mxu0
    %v239 = vadd.f32 0.0, %v238
    %v240 = vpop.f32.mrb[0].mxu0
    %v241 = vadd.f32 0.0, %v240
    %242 = vdwg.mxu0
    %v243 = vld [vmem:[%s5] sm:$0xff]
    %v244 = vld [vmem:[#allocation2] sm:$0xff]
    %v245 = vld [vmem:[#allocation2 + $0x8] sm:$0xff]
    %v246 = vadd.f32 %v244, %v235
    %v247 = vadd.f32 %v245, %v239
    %248 = vadd.xlane.f32.xlu0 %v246
    %v249 = vpop.xlane.xlu0 %248
    %250 = vadd.xlane.f32.xlu0 %v247
    %v251 = vpop.xlane.xlu0 %250
    %v252 = vmul.f32 %v249, 0.03125
    %v253 = vmul.f32 %v251, 0.03125
    %v254 = vsub.f32 %v246, %v252
    %v255 = vsub.f32 %v247, %v253
    %v256 = vsel %vm95, 1, 0
    %vm257 = vcmp.eq.s32.totalorder %v256, 1
    %v258 = vsel %vm257, %v254, 0.0
    %v259 = vsel %vm257, %v255, 0.0
    %v260 = vmul.f32 %v258, %v258
    %v261 = vmul.f32 %v259, %v259
    %262 = vadd.xlane.f32.xlu0 %v260
    %v263 = vpop.xlane.xlu0 %262
    %264 = vadd.xlane.f32.xlu0 %v261
    %v265 = vpop.xlane.xlu0 %264
    %v266 = vmul.f32 %v263, 0.03125
    %v267 = vmul.f32 %v265, 0.03125
    %v268 = vadd.f32 %v266, 1e-05
    %v269 = vadd.f32 %v267, 1e-05
    %v270 = vrsqrt.pop %v268
    %v271 = vrsqrt.pop %v269
    %v272 = vmul.f32 %v258, %v270
    %v273 = vmul.f32 %v259, %v271
    %v274 = vlaneseq
    %v275 = vshrl.u32 %v274, 7
    %v276 = vsub.s32 2, %v275
    %v277 = vrot.slane %v243, %v276
    %v278 = vmul.f32 %v272, %v277
    %v279 = vmul.f32 %v273, %v277
    %v280 = vlaneseq
    %v281 = vshrl.u32 %v280, 7
    %v282 = vsub.s32 3, %v281
    %v283 = vrot.slane %v243, %v282
    %v284 = vadd.f32 %v278, %v283
    %v285 = vadd.f32 %v279, %v283
    %v286 = vpack.c.bf16 %v285, %v284
    %v287 = vld [vmem:[#allocation8] sm:$0xf]
    %v288 = vld [vmem:[#allocation8 + $0x4] sm:$0xf]
    %v289 = vld [vmem:[#allocation8 + $0x8] sm:$0xf]
    %v290 = vld [vmem:[#allocation8 + $0xc] sm:$0xf]
    %v291 = vld [vmem:[#allocation8 + $0x10] sm:$0xf]
    %v292 = vld [vmem:[#allocation8 + $0x14] sm:$0xf]
    %v293 = vld [vmem:[#allocation8 + $0x18] sm:$0xf]
    %v294 = vld [vmem:[#allocation8 + $0x1c] sm:$0xf]
    %v295 = vld [vmem:[#allocation8 + $0x20] sm:$0xf]
    %v296 = vld [vmem:[#allocation8 + $0x24] sm:$0xf]
    %v297 = vld [vmem:[#allocation8 + $0x28] sm:$0xf]
    %v298 = vld [vmem:[#allocation8 + $0x2c] sm:$0xf]
    %v299 = vld [vmem:[#allocation8 + $0x30] sm:$0xf]
    %v300 = vld [vmem:[#allocation8 + $0x34] sm:$0xf]
    %v301 = vld [vmem:[#allocation8 + $0x38] sm:$0xf]
    %v302 = vld [vmem:[#allocation8 + $0x3c] sm:$0xf]
    %v303 = vlaneseq
    %v304 = vshrl.u32 %v303, 7
    %v305 = vsub.s32 0, %v304
    %v306 = vrot.slane %v243, %v305
    %v323 = vunpack.c.l.b16 %v287
    %v324 = vunpack.c.l.b16 %v288
    %v325 = vunpack.c.l.b16 %v289
    %v326 = vunpack.c.l.b16 %v290
    %v327 = vunpack.c.l.b16 %v291
    %v328 = vunpack.c.l.b16 %v292
    %v329 = vunpack.c.l.b16 %v293
    %v330 = vunpack.c.l.b16 %v294
    %v331 = vunpack.c.l.b16 %v295
    %v332 = vunpack.c.l.b16 %v296
    %v333 = vunpack.c.l.b16 %v297
    %v334 = vunpack.c.l.b16 %v298
    %v335 = vunpack.c.l.b16 %v299
    %v336 = vunpack.c.l.b16 %v300
    %v337 = vunpack.c.l.b16 %v301
    %v338 = vunpack.c.l.b16 %v302
    %v339 = vpack.c.b16 %v324, %v323
    %v340 = vpack.c.b16 %v326, %v325
    %v341 = vpack.c.b16 %v328, %v327
    %v342 = vpack.c.b16 %v330, %v329
    %v343 = vpack.c.b16 %v332, %v331
    %v344 = vpack.c.b16 %v334, %v333
    %v345 = vpack.c.b16 %v336, %v335
    %v346 = vpack.c.b16 %v338, %v337
    %355 = vmatprep.subr.bf16.mxu0 0
    %356 = vmatpush1.bf16.msra.mxu0 %v339
    %357 = vmatprep.subr.bf16.mxu0 0
    %358 = vmatpush1.bf16.msra.mxu0 %v340
    %359 = vmatprep.subr.bf16.mxu0 0
    %360 = vmatpush1.bf16.msra.mxu0 %v341
    %361 = vmatprep.subr.bf16.mxu0 0
    %362 = vmatpush1.bf16.msra.mxu0 %v342
    %363 = vmatprep.subr.bf16.mxu0 0
    %364 = vmatpush1.bf16.msra.mxu0 %v343
    %365 = vmatprep.subr.bf16.mxu0 0
    %366 = vmatpush1.bf16.msra.mxu0 %v344
    %367 = vmatprep.subr.bf16.mxu0 0
    %368 = vmatpush1.bf16.msra.mxu0 %v345
    %369 = vmatprep.subr.bf16.mxu0 0
    %370 = vmatpush1.bf16.msra.mxu0 %v346
    %371 = vmatprep.subr.bf16.mxu0 0
    %372 = vmatpush1.bf16.msra.mxu0 0
    %373 = vmatprep.subr.bf16.mxu0 0
    %374 = vmatpush1.bf16.msra.mxu0 0
    %375 = vmatprep.subr.bf16.mxu0 0
    %376 = vmatpush1.bf16.msra.mxu0 0
    %377 = vmatprep.subr.bf16.mxu0 0
    %378 = vmatpush1.bf16.msra.mxu0 0
    %379 = vmatprep.subr.bf16.mxu0 0
    %380 = vmatpush1.bf16.msra.mxu0 0
    %381 = vmatprep.subr.bf16.mxu0 0
    %382 = vmatpush1.bf16.msra.mxu0 0
    %383 = vmatprep.subr.bf16.mxu0 0
    %384 = vmatpush1.bf16.msra.mxu0 0
    %385 = vmatprep.subr.bf16.mxu0 0
    %386 = vmatpush1.bf16.msra.mxu0 0
    %387 = vmatprep.mubr.bf16.mxu0 0
    %388 = vmatmul.mubr.bf16.gmra.mrb[0].mxu0 %v286
    %v389 = vpop.f32.mrb[0].mxu0
    %v390 = vadd.f32 %v306, %v389
    %v391 = vpop.f32.mrb[0].mxu0
    %v392 = vpop.f32.mrb[0].mxu0
    %v393 = vadd.f32 %v306, %v392
    %v394 = vpop.f32.mrb[0].mxu0
    %395 = vdwg.mxu0
    %v396 = vmax.f32 %v390, 0.0
    %v397 = vmax.f32 %v393, 0.0
    %v398 = vpack.c.bf16 %v397, %v396
    %v399 = vld [vmem:[#allocation10] sm:$0xf]
    %v400 = vld [vmem:[#allocation10 + $0x4] sm:$0xf]
    %v401 = vld [vmem:[#allocation10 + $0x8] sm:$0xf]
    %v402 = vld [vmem:[#allocation10 + $0xc] sm:$0xf]
    %v403 = vld [vmem:[#allocation10 + $0x10] sm:$0xf]
    %v404 = vld [vmem:[#allocation10 + $0x14] sm:$0xf]
    %v405 = vld [vmem:[#allocation10 + $0x18] sm:$0xf]
    %v406 = vld [vmem:[#allocation10 + $0x1c] sm:$0xf]
    %v407 = vld [vmem:[#allocation10 + $0x20] sm:$0xf]
    %v408 = vld [vmem:[#allocation10 + $0x24] sm:$0xf]
    %v409 = vld [vmem:[#allocation10 + $0x28] sm:$0xf]
    %v410 = vld [vmem:[#allocation10 + $0x2c] sm:$0xf]
    %v411 = vld [vmem:[#allocation10 + $0x30] sm:$0xf]
    %v412 = vld [vmem:[#allocation10 + $0x34] sm:$0xf]
    %v413 = vld [vmem:[#allocation10 + $0x38] sm:$0xf]
    %v414 = vld [vmem:[#allocation10 + $0x3c] sm:$0xf]
    %v415 = vlaneseq
    %v416 = vshrl.u32 %v415, 7
    %v417 = vsub.s32 1, %v416
    %v418 = vrot.slane %v243, %v417
    %v435 = vunpack.c.l.b16 %v399
    %v436 = vunpack.c.l.b16 %v400
    %v437 = vunpack.c.l.b16 %v401
    %v438 = vunpack.c.l.b16 %v402
    %v439 = vunpack.c.l.b16 %v403
    %v440 = vunpack.c.l.b16 %v404
    %v441 = vunpack.c.l.b16 %v405
    %v442 = vunpack.c.l.b16 %v406
    %v443 = vunpack.c.l.b16 %v407
    %v444 = vunpack.c.l.b16 %v408
    %v445 = vunpack.c.l.b16 %v409
    %v446 = vunpack.c.l.b16 %v410
    %v447 = vunpack.c.l.b16 %v411
    %v448 = vunpack.c.l.b16 %v412
    %v449 = vunpack.c.l.b16 %v413
    %v450 = vunpack.c.l.b16 %v414
    %v451 = vpack.c.b16 %v436, %v435
    %v452 = vpack.c.b16 %v438, %v437
    %v453 = vpack.c.b16 %v440, %v439
    %v454 = vpack.c.b16 %v442, %v441
    %v455 = vpack.c.b16 %v444, %v443
    %v456 = vpack.c.b16 %v446, %v445
    %v457 = vpack.c.b16 %v448, %v447
    %v458 = vpack.c.b16 %v450, %v449
    %467 = vmatprep.subr.bf16.mxu0 0
    %468 = vmatpush1.bf16.msra.mxu0 %v451
    %469 = vmatprep.subr.bf16.mxu0 0
    %470 = vmatpush1.bf16.msra.mxu0 %v452
    %471 = vmatprep.subr.bf16.mxu0 0
    %472 = vmatpush1.bf16.msra.mxu0 %v453
    %473 = vmatprep.subr.bf16.mxu0 0
    %474 = vmatpush1.bf16.msra.mxu0 %v454
    %475 = vmatprep.subr.bf16.mxu0 0
    %476 = vmatpush1.bf16.msra.mxu0 %v455
    %477 = vmatprep.subr.bf16.mxu0 0
    %478 = vmatpush1.bf16.msra.mxu0 %v456
    %479 = vmatprep.subr.bf16.mxu0 0
    %480 = vmatpush1.bf16.msra.mxu0 %v457
    %481 = vmatprep.subr.bf16.mxu0 0
    %482 = vmatpush1.bf16.msra.mxu0 %v458
    %483 = vmatprep.subr.bf16.mxu0 0
    %484 = vmatpush1.bf16.msra.mxu0 0
    %485 = vmatprep.subr.bf16.mxu0 0
    %486 = vmatpush1.bf16.msra.mxu0 0
    %487 = vmatprep.subr.bf16.mxu0 0
    %488 = vmatpush1.bf16.msra.mxu0 0
    %489 = vmatprep.subr.bf16.mxu0 0
    %490 = vmatpush1.bf16.msra.mxu0 0
    %491 = vmatprep.subr.bf16.mxu0 0
    %492 = vmatpush1.bf16.msra.mxu0 0
    %493 = vmatprep.subr.bf16.mxu0 0
    %494 = vmatpush1.bf16.msra.mxu0 0
    %495 = vmatprep.subr.bf16.mxu0 0
    %496 = vmatpush1.bf16.msra.mxu0 0
    %497 = vmatprep.subr.bf16.mxu0 0
    %498 = vmatpush1.bf16.msra.mxu0 0
    %499 = vmatprep.mubr.bf16.mxu0 0
    %500 = vmatmul.mubr.bf16.gmra.mrb[0].mxu0 %v398
    %v501 = vpop.f32.mrb[0].mxu0
    %v502 = vadd.f32 %v418, %v501
    %v503 = vpop.f32.mrb[0].mxu0
    %v504 = vpop.f32.mrb[0].mxu0
    %v505 = vadd.f32 %v418, %v504
    %v506 = vpop.f32.mrb[0].mxu0
    %507 = vdwg.mxu0
    %v508 = vadd.f32 %v502, %v284
    %v509 = vadd.f32 %v505, %v285
    %510 = vadd.xlane.f32.xlu0 %v508
    %v511 = vpop.xlane.xlu0 %510
    %512 = vadd.xlane.f32.xlu0 %v509
    %v513 = vpop.xlane.xlu0 %512
    %v514 = vmul.f32 %v511, 0.03125
    %v515 = vmul.f32 %v513, 0.03125
    %v516 = vsub.f32 %v508, %v514
    %v517 = vsub.f32 %v509, %v515
    %v518 = vsel %vm257, %v516, 0.0
    %v519 = vsel %vm257, %v517, 0.0
    %v520 = vmul.f32 %v518, %v518
    %v521 = vmul.f32 %v519, %v519
    %522 = vadd.xlane.f32.xlu0 %v520
    %v523 = vpop.xlane.xlu0 %522
    %524 = vadd.xlane.f32.xlu0 %v521
    %v525 = vpop.xlane.xlu0 %524
    %v526 = vmul.f32 %v523, 0.03125
    %v527 = vmul.f32 %v525, 0.03125
    %v528 = vadd.f32 %v526, 1e-05
    %v529 = vadd.f32 %v527, 1e-05
    %v530 = vrsqrt.pop %v528
    %v531 = vrsqrt.pop %v529
    %v532 = vmul.f32 %v518, %v530
    %v533 = vmul.f32 %v519, %v531
    %v534 = vlaneseq
    %v535 = vshrl.u32 %v534, 7
    %v536 = vsub.s32 4, %v535
    %v537 = vrot.slane %v243, %v536
    %v538 = vmul.f32 %v532, %v537
    %v539 = vmul.f32 %v533, %v537
    %v540 = vlaneseq
    %v541 = vshrl.u32 %v540, 7
    %v542 = vsub.s32 5, %v541
    %v543 = vrot.slane %v243, %v542
    %v544 = vadd.f32 %v538, %v543
    %v545 = vadd.f32 %v539, %v543
    %546 = vst [vmem:[#allocation11] sm:$0xff] %v544
    %547 = vst [vmem:[#allocation11 + $0x8] sm:$0xff] %v545
    %s548 = scalar_lea.vmem %s5, 8
    %v549 = vld [vmem:[%s548] sm:$0xff]
    %s550 = scalar_lea.vmem [#allocation2], 16
    %v551 = vld [vmem:[%s550] sm:$0xff]
    %v552 = vld [vmem:[%s550 + $0x8] sm:$0xff]
    %v553 = vadd.f32 %v551, %v237
    %v554 = vadd.f32 %v552, %v241
    %555 = vadd.xlane.f32.xlu0 %v553
    %v556 = vpop.xlane.xlu0 %555
    %557 = vadd.xlane.f32.xlu0 %v554
    %v558 = vpop.xlane.xlu0 %557
    %v559 = vmul.f32 %v556, 0.03125
    %v560 = vmul.f32 %v558, 0.03125
    %v561 = vsub.f32 %v553, %v559
    %v562 = vsub.f32 %v554, %v560
    %v563 = vsel %vm257, %v561, 0.0
    %v564 = vsel %vm257, %v562, 0.0
    %v565 = vmul.f32 %v563, %v563
    %v566 = vmul.f32 %v564, %v564
    %567 = vadd.xlane.f32.xlu0 %v565
    %v568 = vpop.xlane.xlu0 %567
    %569 = vadd.xlane.f32.xlu0 %v566
    %v570 = vpop.xlane.xlu0 %569
    %v571 = vmul.f32 %v568, 0.03125
    %v572 = vmul.f32 %v570, 0.03125
    %v573 = vadd.f32 %v571, 1e-05
    %v574 = vadd.f32 %v572, 1e-05
    %v575 = vrsqrt.pop %v573
    %v576 = vrsqrt.pop %v574
    %v577 = vmul.f32 %v563, %v575
    %v578 = vmul.f32 %v564, %v576
    %v579 = vlaneseq
    %v580 = vshrl.u32 %v579, 7
    %v581 = vsub.s32 2, %v580
    %v582 = vrot.slane %v549, %v581
    %v583 = vmul.f32 %v577, %v582
    %v584 = vmul.f32 %v578, %v582
    %v585 = vlaneseq
    %v586 = vshrl.u32 %v585, 7
    %v587 = vsub.s32 3, %v586
    %v588 = vrot.slane %v549, %v587
    %v589 = vadd.f32 %v583, %v588
    %v590 = vadd.f32 %v584, %v588
    %v591 = vpack.c.bf16 %v590, %v589
    %s592 = scalar_lea.vmem [#allocation8], 64
    %v593 = vld [vmem:[%s592] sm:$0xf]
    %v594 = vld [vmem:[%s592 + $0x4] sm:$0xf]
    %v595 = vld [vmem:[%s592 + $0x8] sm:$0xf]
    %v596 = vld [vmem:[%s592 + $0xc] sm:$0xf]
    %v597 = vld [vmem:[%s592 + $0x10] sm:$0xf]
    %v598 = vld [vmem:[%s592 + $0x14] sm:$0xf]
    %v599 = vld [vmem:[%s592 + $0x18] sm:$0xf]
    %v600 = vld [vmem:[%s592 + $0x1c] sm:$0xf]
    %v601 = vld [vmem:[%s592 + $0x20] sm:$0xf]
    %v602 = vld [vmem:[%s592 + $0x24] sm:$0xf]
    %v603 = vld [vmem:[%s592 + $0x28] sm:$0xf]
    %v604 = vld [vmem:[%s592 + $0x2c] sm:$0xf]
    %v605 = vld [vmem:[%s592 + $0x30] sm:$0xf]
    %v606 = vld [vmem:[%s592 + $0x34] sm:$0xf]
    %v607 = vld [vmem:[%s592 + $0x38] sm:$0xf]
    %v608 = vld [vmem:[%s592 + $0x3c] sm:$0xf]
    %v609 = vlaneseq
    %v610 = vshrl.u32 %v609, 7
    %v611 = vsub.s32 0, %v610
    %v612 = vrot.slane %v549, %v611
    %v629 = vunpack.c.l.b16 %v593
    %v630 = vunpack.c.l.b16 %v594
    %v631 = vunpack.c.l.b16 %v595
    %v632 = vunpack.c.l.b16 %v596
    %v633 = vunpack.c.l.b16 %v597
    %v634 = vunpack.c.l.b16 %v598
    %v635 = vunpack.c.l.b16 %v599
    %v636 = vunpack.c.l.b16 %v600
    %v637 = vunpack.c.l.b16 %v601
    %v638 = vunpack.c.l.b16 %v602
    %v639 = vunpack.c.l.b16 %v603
    %v640 = vunpack.c.l.b16 %v604
    %v641 = vunpack.c.l.b16 %v605
    %v642 = vunpack.c.l.b16 %v606
    %v643 = vunpack.c.l.b16 %v607
    %v644 = vunpack.c.l.b16 %v608
    %v645 = vpack.c.b16 %v630, %v629
    %v646 = vpack.c.b16 %v632, %v631
    %v647 = vpack.c.b16 %v634, %v633
    %v648 = vpack.c.b16 %v636, %v635
    %v649 = vpack.c.b16 %v638, %v637
    %v650 = vpack.c.b16 %v640, %v639
    %v651 = vpack.c.b16 %v642, %v641
    %v652 = vpack.c.b16 %v644, %v643
    %661 = vmatprep.subr.bf16.mxu0 0
    %662 = vmatpush1.bf16.msra.mxu0 %v645
    %663 = vmatprep.subr.bf16.mxu0 0
    %664 = vmatpush1.bf16.msra.mxu0 %v646
    %665 = vmatprep.subr.bf16.mxu0 0
    %666 = vmatpush1.bf16.msra.mxu0 %v647
    %667 = vmatprep.subr.bf16.mxu0 0
    %668 = vmatpush1.bf16.msra.mxu0 %v648
    %669 = vmatprep.subr.bf16.mxu0 0
    %670 = vmatpush1.bf16.msra.mxu0 %v649
    %671 = vmatprep.subr.bf16.mxu0 0
    %672 = vmatpush1.bf16.msra.mxu0 %v650
    %673 = vmatprep.subr.bf16.mxu0 0
    %674 = vmatpush1.bf16.msra.mxu0 %v651
    %675 = vmatprep.subr.bf16.mxu0 0
    %676 = vmatpush1.bf16.msra.mxu0 %v652
    %677 = vmatprep.subr.bf16.mxu0 0
    %678 = vmatpush1.bf16.msra.mxu0 0
    %679 = vmatprep.subr.bf16.mxu0 0
    %680 = vmatpush1.bf16.msra.mxu0 0
    %681 = vmatprep.subr.bf16.mxu0 0
    %682 = vmatpush1.bf16.msra.mxu0 0
    %683 = vmatprep.subr.bf16.mxu0 0
    %684 = vmatpush1.bf16.msra.mxu0 0
    %685 = vmatprep.subr.bf16.mxu0 0
    %686 = vmatpush1.bf16.msra.mxu0 0
    %687 = vmatprep.subr.bf16.mxu0 0
    %688 = vmatpush1.bf16.msra.mxu0 0
    %689 = vmatprep.subr.bf16.mxu0 0
    %690 = vmatpush1.bf16.msra.mxu0 0
    %691 = vmatprep.subr.bf16.mxu0 0
    %692 = vmatpush1.bf16.msra.mxu0 0
    %693 = vmatprep.mubr.bf16.mxu0 0
    %694 = vmatmul.mubr.bf16.gmra.mrb[0].mxu0 %v591
    %v695 = vpop.f32.mrb[0].mxu0
    %v696 = vadd.f32 %v612, %v695
    %v697 = vpop.f32.mrb[0].mxu0
    %v698 = vpop.f32.mrb[0].mxu0
    %v699 = vadd.f32 %v612, %v698
    %v700 = vpop.f32.mrb[0].mxu0
    %701 = vdwg.mxu0
    %v702 = vmax.f32 %v696, 0.0
    %v703 = vmax.f32 %v699, 0.0
    %v704 = vpack.c.bf16 %v703, %v702
    %s705 = scalar_lea.vmem [#allocation10], 64
    %v706 = vld [vmem:[%s705] sm:$0xf]
    %v707 = vld [vmem:[%s705 + $0x4] sm:$0xf]
    %v708 = vld [vmem:[%s705 + $0x8] sm:$0xf]
    %v709 = vld [vmem:[%s705 + $0xc] sm:$0xf]
    %v710 = vld [vmem:[%s705 + $0x10] sm:$0xf]
    %v711 = vld [vmem:[%s705 + $0x14] sm:$0xf]
    %v712 = vld [vmem:[%s705 + $0x18] sm:$0xf]
    %v713 = vld [vmem:[%s705 + $0x1c] sm:$0xf]
    %v714 = vld [vmem:[%s705 + $0x20] sm:$0xf]
    %v715 = vld [vmem:[%s705 + $0x24] sm:$0xf]
    %v716 = vld [vmem:[%s705 + $0x28] sm:$0xf]
    %v717 = vld [vmem:[%s705 + $0x2c] sm:$0xf]
    %v718 = vld [vmem:[%s705 + $0x30] sm:$0xf]
    %v719 = vld [vmem:[%s705 + $0x34] sm:$0xf]
    %v720 = vld [vmem:[%s705 + $0x38] sm:$0xf]
    %v721 = vld [vmem:[%s705 + $0x3c] sm:$0xf]
    %v722 = vlaneseq
    %v723 = vshrl.u32 %v722, 7
    %v724 = vsub.s32 1, %v723
    %v725 = vrot.slane %v549, %v724
    %v742 = vunpack.c.l.b16 %v706
    %v743 = vunpack.c.l.b16 %v707
    %v744 = vunpack.c.l.b16 %v708
    %v745 = vunpack.c.l.b16 %v709
    %v746 = vunpack.c.l.b16 %v710
    %v747 = vunpack.c.l.b16 %v711
    %v748 = vunpack.c.l.b16 %v712
    %v749 = vunpack.c.l.b16 %v713
    %v750 = vunpack.c.l.b16 %v714
    %v751 = vunpack.c.l.b16 %v715
    %v752 = vunpack.c.l.b16 %v716
    %v753 = vunpack.c.l.b16 %v717
    %v754 = vunpack.c.l.b16 %v718
    %v755 = vunpack.c.l.b16 %v719
    %v756 = vunpack.c.l.b16 %v720
    %v757 = vunpack.c.l.b16 %v721
    %v758 = vpack.c.b16 %v743, %v742
    %v759 = vpack.c.b16 %v745, %v744
    %v760 = vpack.c.b16 %v747, %v746
    %v761 = vpack.c.b16 %v749, %v748
    %v762 = vpack.c.b16 %v751, %v750
    %v763 = vpack.c.b16 %v753, %v752
    %v764 = vpack.c.b16 %v755, %v754
    %v765 = vpack.c.b16 %v757, %v756
    %774 = vmatprep.subr.bf16.mxu0 0
    %775 = vmatpush1.bf16.msra.mxu0 %v758
    %776 = vmatprep.subr.bf16.mxu0 0
    %777 = vmatpush1.bf16.msra.mxu0 %v759
    %778 = vmatprep.subr.bf16.mxu0 0
    %779 = vmatpush1.bf16.msra.mxu0 %v760
    %780 = vmatprep.subr.bf16.mxu0 0
    %781 = vmatpush1.bf16.msra.mxu0 %v761
    %782 = vmatprep.subr.bf16.mxu0 0
    %783 = vmatpush1.bf16.msra.mxu0 %v762
    %784 = vmatprep.subr.bf16.mxu0 0
    %785 = vmatpush1.bf16.msra.mxu0 %v763
    %786 = vmatprep.subr.bf16.mxu0 0
    %787 = vmatpush1.bf16.msra.mxu0 %v764
    %788 = vmatprep.subr.bf16.mxu0 0
    %789 = vmatpush1.bf16.msra.mxu0 %v765
    %790 = vmatprep.subr.bf16.mxu0 0
    %791 = vmatpush1.bf16.msra.mxu0 0
    %792 = vmatprep.subr.bf16.mxu0 0
    %793 = vmatpush1.bf16.msra.mxu0 0
    %794 = vmatprep.subr.bf16.mxu0 0
    %795 = vmatpush1.bf16.msra.mxu0 0
    %796 = vmatprep.subr.bf16.mxu0 0
    %797 = vmatpush1.bf16.msra.mxu0 0
    %798 = vmatprep.subr.bf16.mxu0 0
    %799 = vmatpush1.bf16.msra.mxu0 0
    %800 = vmatprep.subr.bf16.mxu0 0
    %801 = vmatpush1.bf16.msra.mxu0 0
    %802 = vmatprep.subr.bf16.mxu0 0
    %803 = vmatpush1.bf16.msra.mxu0 0
    %804 = vmatprep.subr.bf16.mxu0 0
    %805 = vmatpush1.bf16.msra.mxu0 0
    %806 = vmatprep.mubr.bf16.mxu0 0
    %807 = vmatmul.mubr.bf16.gmra.mrb[0].mxu0 %v704
    %v808 = vpop.f32.mrb[0].mxu0
    %v809 = vadd.f32 %v725, %v808
    %v810 = vpop.f32.mrb[0].mxu0
    %v811 = vpop.f32.mrb[0].mxu0
    %v812 = vadd.f32 %v725, %v811
    %v813 = vpop.f32.mrb[0].mxu0
    %814 = vdwg.mxu0
    %v815 = vadd.f32 %v809, %v589
    %v816 = vadd.f32 %v812, %v590
    %817 = vadd.xlane.f32.xlu0 %v815
    %v818 = vpop.xlane.xlu0 %817
    %819 = vadd.xlane.f32.xlu0 %v816
    %v820 = vpop.xlane.xlu0 %819
    %v821 = vmul.f32 %v818, 0.03125
    %v822 = vmul.f32 %v820, 0.03125
    %v823 = vsub.f32 %v815, %v821
    %v824 = vsub.f32 %v816, %v822
    %v825 = vsel %vm257, %v823, 0.0
    %v826 = vsel %vm257, %v824, 0.0
    %v827 = vmul.f32 %v825, %v825
    %v828 = vmul.f32 %v826, %v826
    %829 = vadd.xlane.f32.xlu0 %v827
    %v830 = vpop.xlane.xlu0 %829
    %831 = vadd.xlane.f32.xlu0 %v828
    %v832 = vpop.xlane.xlu0 %831
    %v833 = vmul.f32 %v830, 0.03125
    %v834 = vmul.f32 %v832, 0.03125
    %v835 = vadd.f32 %v833, 1e-05
    %v836 = vadd.f32 %v834, 1e-05
    %v837 = vrsqrt.pop %v835
    %v838 = vrsqrt.pop %v836
    %v839 = vmul.f32 %v825, %v837
    %v840 = vmul.f32 %v826, %v838
    %v841 = vlaneseq
    %v842 = vshrl.u32 %v841, 7
    %v843 = vsub.s32 4, %v842
    %v844 = vrot.slane %v549, %v843
    %v845 = vmul.f32 %v839, %v844
    %v846 = vmul.f32 %v840, %v844
    %v847 = vlaneseq
    %v848 = vshrl.u32 %v847, 7
    %v849 = vsub.s32 5, %v848
    %v850 = vrot.slane %v549, %v849
    %v851 = vadd.f32 %v845, %v850
    %v852 = vadd.f32 %v846, %v850
    %s853 = scalar_lea.vmem [#allocation11], 16
    %854 = vst [vmem:[%s853] sm:$0xff] %v851
    %855 = vst [vmem:[%s853 + $0x8] sm:$0xff] %v852
    // Predicated region
    $region46: #{tpu_custom_call.1} parent=1 // pred_check
      _
    $region47: #{tpu_custom_call.1} parent=1 // pred_check_branch
      %857 = sbr.rel (0) target = $region49
    $region48: #{tpu_custom_call.1} parent=1 // pred_region
      %s859 = ssub.s32 512, 512
      %860 = vsyncadd [#allocation4], %s859
      %s861 = sshll.u32 [#allocation11], 4
      %s862 = int_to_ptr.vmem [resolvable:$true] %s861
      %867 = dma.vmem_to_hbm [thread:$0]  %s862, 512, %s6, [#allocation4], 128, 128, 8
    $region49: #{tpu_custom_call.1} parent=1 // pred_fallthru
      _
    // Predicated region
    $region50: #{tpu_custom_call.1} parent=1 // pred_check
      _
    $region51: #{tpu_custom_call.1} parent=1 // pred_check_branch
      %869 = sbr.rel (0) target = $region53
    $region52: #{tpu_custom_call.1} parent=1 // pred_region
      %870 = dma.done [#allocation4], 512
    $region53: #{tpu_custom_call.1} parent=1 // pred_fallthru
      _
    %871 = vsyncpa [#allocation3], 1
    %872 = vsyncpa [#allocation6], 1
    %873 = vsyncpa [#allocation9], 1
    %874 = vsyncpa [#allocation4], 1

// kernel: tpu_custom_call.1
$region0: #{tpu_custom_call.1}
  #allocation0 [shape = 'u32[]', space=smem, size = 0x4, offset = 0x4, fixed_abs, tag = 'smem constant byte address 0x4 - core index']
  #allocation1 [shape = 'u32[144,128]{1,0:T(1,128)}', space=vmem, size = 0x12000, scoped, tag = 'internal scratch']
  %s0 = inlined_call_operand.hbm [shape: f32[2,16,128], index: 0, kind: input, shape index: {}]
  %s1 = inlined_call_operand.hbm [shape: bf16[16,128], index: 1, kind: input, shape index: {}]
  %s2 = inlined_call_operand.hbm [shape: bf16[128,256], index: 2, kind: input, shape index: {}]
  %s3 = inlined_call_operand.hbm [shape: bf16[2,128,128], index: 3, kind: input, shape index: {}]
  %s4 = inlined_call_operand.hbm [shape: bf16[2,128,128], index: 4, kind: input, shape index: {}]
  %s5 = inlined_call_operand.vmem [shape: f32[2,8,128], index: 5, kind: input, shape index: {}]
  %s6 = inlined_call_operand.hbm [shape: f32[2,16,128], index: 6, kind: output, shape index: {}]
  %s7 = sld [smem:[#allocation0]]
  $region54: #{tpu_custom_call.1} parent=0
    _
  %s9 = ssub.s32 1, %s7
  %s10 = scalar_select 0, %s9, %s7
  $region1: #{tpu_custom_call.1} parent=0
    #allocation2 [shape = 'u8[16384]{0}', space=vmem, size = 0x4000, scoped, tag = 'input window, operand 0, single buffered']
    #allocation3 [shape = 's32[1]{0}', space=sflag, size = 0x4, scoped, tag = 'scoped memory for tpu_custom_call.1']
    #allocation4 [shape = 's32[1]{0}', space=sflag, size = 0x4, scoped, tag = 'scoped memory for tpu_custom_call.1']
    #allocation5 [shape = 'u8[4096]{0}', space=vmem, size = 0x1000, scoped, tag = 'input window, operand 1, single buffered']
    #allocation6 [shape = 's32[1]{0}', space=sflag, size = 0x4, scoped, tag = 'scoped memory for tpu_custom_call.1']
    #allocation7 [shape = 'u8[65536]{0}', space=vmem, size = 0x10000, scoped, tag = 'input window, operand 2, single buffered']
    #allocation8 [shape = 'u8[65536]{0}', space=vmem, size = 0x10000, scoped, tag = 'input window, operand 3, single buffered']
    #allocation9 [shape = 's32[1]{0}', space=sflag, size = 0x4, scoped, tag = 'scoped memory for tpu_custom_call.1']
    #allocation10 [shape = 'u8[65536]{0}', space=vmem, size = 0x10000, scoped, tag = 'input window, operand 4, single buffered']
    #allocation11 [shape = 'u8[16384]{0}', space=vmem, size = 0x4000, scoped, tag = 'output window, operand 0, single buffered']
    %11 = vsyncpa [#allocation3], 0
    %12 = vsyncpa [#allocation6], 0
    %13 = vsyncpa [#allocation9], 0
    %14 = vsyncpa [#allocation4], 0
    // Predicated region
    $region2: #{tpu_custom_call.1} parent=1 // pred_check
      _
    $region3: #{tpu_custom_call.1} parent=1 // pred_check_branch
      %16 = sbr.rel (0) target = $region5
    $region4: #{tpu_custom_call.1} parent=1 // pred_region
      %s18 = ssub.s32 512, 512
      %19 = vsyncadd [#allocation3], %s18
      %s20 = sshll.u32 [#allocation2], 4
      %s21 = int_to_ptr.vmem [resolvable:$true] %s20
      %26 = dma.hbm_to_vmem [thread:$0]  %s0, 512, %s21, [#allocation3], 128, 128, 8
    $region5: #{tpu_custom_call.1} parent=1 // pred_fallthru
      _
    // Predicated region
    $region6: #{tpu_custom_call.1} parent=1 // pred_check
      _
    $region7: #{tpu_custom_call.1} parent=1 // pred_check_branch
      %28 = sbr.rel (0) target = $region9
    $region8: #{tpu_custom_call.1} parent=1 // pred_region
      %s30 = ssub.s32 128, 128
      %31 = vsyncadd [#allocation6], %s30
      %s32 = sshll.u32 [#allocation5], 4
      %s33 = int_to_ptr.vmem [resolvable:$true] %s32
      %38 = dma.hbm_to_vmem [thread:$0]  %s1, 128, %s33, [#allocation6], 64, 64, 4
    $region9: #{tpu_custom_call.1} parent=1 // pred_fallthru
      _
    // Predicated region
    $region10: #{tpu_custom_call.1} parent=1 // pred_check
      _
    $region11: #{tpu_custom_call.1} parent=1 // pred_check_branch
      %40 = sbr.rel (0) target = $region13
    $region12: #{tpu_custom_call.1} parent=1 // pred_region
      %s42 = ssub.s32 2048, 2048
      %43 = vsyncadd [#allocation6], %s42
      %s44 = sshll.u32 [#allocation7], 4
      %s45 = int_to_ptr.vmem [resolvable:$true] %s44
      %50 = dma.hbm_to_vmem [thread:$0]  %s2, 2048, %s45, [#allocation6], 128, 128, 8
    $region13: #{tpu_custom_call.1} parent=1 // pred_fallthru
      _
    // Predicated region
    $region14: #{tpu_custom_call.1} parent=1 // pred_check
      _
    $region15: #{tpu_custom_call.1} parent=1 // pred_check_branch
      %52 = sbr.rel (0) target = $region17
    $region16: #{tpu_custom_call.1} parent=1 // pred_region
      %s54 = ssub.s32 2048, 2048
      %55 = vsyncadd [#allocation9], %s54
      %s56 = sshll.u32 [#allocation8], 4
      %s57 = int_to_ptr.vmem [resolvable:$true] %s56
      %62 = dma.hbm_to_vmem [thread:$0]  %s3, 2048, %s57, [#allocation9], 64, 64, 4
    $region17: #{tpu_custom_call.1} parent=1 // pred_fallthru
      _
    // Predicated region
    $region18: #{tpu_custom_call.1} parent=1 // pred_check
      _
    $region19: #{tpu_custom_call.1} parent=1 // pred_check_branch
      %64 = sbr.rel (0) target = $region21
    $region20: #{tpu_custom_call.1} parent=1 // pred_region
      %s66 = ssub.s32 2048, 2048
      %67 = vsyncadd [#allocation9], %s66
      %s68 = sshll.u32 [#allocation10], 4
      %s69 = int_to_ptr.vmem [resolvable:$true] %s68
      %74 = dma.hbm_to_vmem [thread:$0]  %s4, 2048, %s69, [#allocation9], 64, 64, 4
    $region21: #{tpu_custom_call.1} parent=1 // pred_fallthru
      _
    // Predicated region
    $region22: #{tpu_custom_call.1} parent=1 // pred_check
      _
    $region23: #{tpu_custom_call.1} parent=1 // pred_check_branch
      %76 = sbr.rel (0) target = $region25
    $region24: #{tpu_custom_call.1} parent=1 // pred_region
      _
    $region25: #{tpu_custom_call.1} parent=1 // pred_fallthru
      _
    // Predicated region
    $region26: #{tpu_custom_call.1} parent=1 // pred_check
      _
    $region27: #{tpu_custom_call.1} parent=1 // pred_check_branch
      %78 = sbr.rel (0) target = $region29
    $region28: #{tpu_custom_call.1} parent=1 // pred_region
      %79 = dma.done [#allocation3], 512
    $region29: #{tpu_custom_call.1} parent=1 // pred_fallthru
      _
    // Predicated region
    $region30: #{tpu_custom_call.1} parent=1 // pred_check
      _
    $region31: #{tpu_custom_call.1} parent=1 // pred_check_branch
      %81 = sbr.rel (0) target = $region33
    $region32: #{tpu_custom_call.1} parent=1 // pred_region
      %82 = dma.done [#allocation6], 128
    $region33: #{tpu_custom_call.1} parent=1 // pred_fallthru
      _
    // Predicated region
    $region34: #{tpu_custom_call.1} parent=1 // pred_check
      _
    $region35: #{tpu_custom_call.1} parent=1 // pred_check_branch
      %84 = sbr.rel (0) target = $region37
    $region36: #{tpu_custom_call.1} parent=1 // pred_region
      %85 = dma.done [#allocation6], 2048
    $region37: #{tpu_custom_call.1} parent=1 // pred_fallthru
      _
    // Predicated region
    $region38: #{tpu_custom_call.1} parent=1 // pred_check
      _
    $region39: #{tpu_custom_call.1} parent=1 // pred_check_branch
      %87 = sbr.rel (0) target = $region41
    $region40: #{tpu_custom_call.1} parent=1 // pred_region
      %88 = dma.done [#allocation9], 2048
    $region41: #{tpu_custom_call.1} parent=1 // pred_fallthru
      _
    // Predicated region
    $region42: #{tpu_custom_call.1} parent=1 // pred_check
      _
    $region43: #{tpu_custom_call.1} parent=1 // pred_check_branch
      %90 = sbr.rel (0) target = $region45
    $region44: #{tpu_custom_call.1} parent=1 // pred_region
      %91 = dma.done [#allocation9], 2048
    $region45: #{tpu_custom_call.1} parent=1 // pred_fallthru
      _
    %v93 = vlaneseq
    %v94 = vand.u32 %v93, 127
    %vm95 = vcmp.lt.s32.totalorder %v94, 32
    %v96 = vld [vmem:[#allocation5] sm:$0xf]
    %v97 = vld [vmem:[#allocation5 + $0x4] sm:$0xf]
    %v98 = vld [vmem:[#allocation7] sm:$0xff]
    %v99 = vld [vmem:[#allocation7 + $0x8] sm:$0xff]
    %v100 = vld [vmem:[#allocation7 + $0x10] sm:$0xff]
    %v101 = vld [vmem:[#allocation7 + $0x18] sm:$0xff]
    %v102 = vld [vmem:[#allocation7 + $0x20] sm:$0xff]
    %v103 = vld [vmem:[#allocation7 + $0x28] sm:$0xff]
    %v104 = vld [vmem:[#allocation7 + $0x30] sm:$0xff]
    %v105 = vld [vmem:[#allocation7 + $0x38] sm:$0xff]
    %v106 = vld [vmem:[#allocation7 + $0x40] sm:$0xff]
    %v107 = vld [vmem:[#allocation7 + $0x48] sm:$0xff]
    %v108 = vld [vmem:[#allocation7 + $0x50] sm:$0xff]
    %v109 = vld [vmem:[#allocation7 + $0x58] sm:$0xff]
    %v110 = vld [vmem:[#allocation7 + $0x60] sm:$0xff]
    %v111 = vld [vmem:[#allocation7 + $0x68] sm:$0xff]
    %v112 = vld [vmem:[#allocation7 + $0x70] sm:$0xff]
    %v113 = vld [vmem:[#allocation7 + $0x78] sm:$0xff]
    %v116 = vunpack.c.l.b16 %v96
    %v117 = vunpack.c.l.b16 %v97
    %v118 = vpack.c.b16 %v117, %v116
    %v136 = vunpack.c.l.b16 %v98
    %v137 = vunpack.c.h.b16 %v98
    %v138 = vunpack.c.l.b16 %v99
    %v139 = vunpack.c.h.b16 %v99
    %v140 = vunpack.c.l.b16 %v100
    %v141 = vunpack.c.h.b16 %v100
    %v142 = vunpack.c.l.b16 %v101
    %v143 = vunpack.c.h.b16 %v101
    %v144 = vunpack.c.l.b16 %v102
    %v145 = vunpack.c.h.b16 %v102
    %v146 = vunpack.c.l.b16 %v103
    %v147 = vunpack.c.h.b16 %v103
    %v148 = vunpack.c.l.b16 %v104
    %v149 = vunpack.c.h.b16 %v104
    %v150 = vunpack.c.l.b16 %v105
    %v151 = vunpack.c.h.b16 %v105
    %v152 = vunpack.c.l.b16 %v106
    %v153 = vunpack.c.h.b16 %v106
    %v154 = vunpack.c.l.b16 %v107
    %v155 = vunpack.c.h.b16 %v107
    %v156 = vunpack.c.l.b16 %v108
    %v157 = vunpack.c.h.b16 %v108
    %v158 = vunpack.c.l.b16 %v109
    %v159 = vunpack.c.h.b16 %v109
    %v160 = vunpack.c.l.b16 %v110
    %v161 = vunpack.c.h.b16 %v110
    %v162 = vunpack.c.l.b16 %v111
    %v163 = vunpack.c.h.b16 %v111
    %v164 = vunpack.c.l.b16 %v112
    %v165 = vunpack.c.h.b16 %v112
    %v166 = vunpack.c.l.b16 %v113
    %v167 = vunpack.c.h.b16 %v113
    %v168 = vpack.c.b16 %v138, %v136
    %v169 = vpack.c.b16 %v139, %v137
    %v170 = vpack.c.b16 %v142, %v140
    %v171 = vpack.c.b16 %v143, %v141
    %v172 = vpack.c.b16 %v146, %v144
    %v173 = vpack.c.b16 %v147, %v145
    %v174 = vpack.c.b16 %v150, %v148
    %v175 = vpack.c.b16 %v151, %v149
    %v176 = vpack.c.b16 %v154, %v152
    %v177 = vpack.c.b16 %v155, %v153
    %v178 = vpack.c.b16 %v158, %v156
    %v179 = vpack.c.b16 %v159, %v157
    %v180 = vpack.c.b16 %v162, %v160
    %v181 = vpack.c.b16 %v163, %v161
    %v182 = vpack.c.b16 %v166, %v164
    %v183 = vpack.c.b16 %v167, %v165
    %200 = vmatprep.subr.bf16.mxu0 %v169
    %201 = vmatpush1.bf16.msra.mxu0 %v168
    %202 = vmatprep.subr.bf16.mxu0 %v171
    %203 = vmatpush1.bf16.msra.mxu0 %v170
    %204 = vmatprep.subr.bf16.mxu0 %v173
    %205 = vmatpush1.bf16.msra.mxu0 %v172
    %206 = vmatprep.subr.bf16.mxu0 %v175
    %207 = vmatpush1.bf16.msra.mxu0 %v174
    %208 = vmatprep.subr.bf16.mxu0 %v177
    %209 = vmatpush1.bf16.msra.mxu0 %v176
    %210 = vmatprep.subr.bf16.mxu0 %v179
    %211 = vmatpush1.bf16.msra.mxu0 %v178
    %212 = vmatprep.subr.bf16.mxu0 %v181
    %213 = vmatpush1.bf16.msra.mxu0 %v180
    %214 = vmatprep.subr.bf16.mxu0 %v183
    %215 = vmatpush1.bf16.msra.mxu0 %v182
    %216 = vmatprep.subr.bf16.mxu0 0
    %217 = vmatpush1.bf16.msra.mxu0 0
    %218 = vmatprep.subr.bf16.mxu0 0
    %219 = vmatpush1.bf16.msra.mxu0 0
    %220 = vmatprep.subr.bf16.mxu0 0
    %221 = vmatpush1.bf16.msra.mxu0 0
    %222 = vmatprep.subr.bf16.mxu0 0
    %223 = vmatpush1.bf16.msra.mxu0 0
    %224 = vmatprep.subr.bf16.mxu0 0
    %225 = vmatpush1.bf16.msra.mxu0 0
    %226 = vmatprep.subr.bf16.mxu0 0
    %227 = vmatpush1.bf16.msra.mxu0 0
    %228 = vmatprep.subr.bf16.mxu0 0
    %229 = vmatpush1.bf16.msra.mxu0 0
    %230 = vmatprep.subr.bf16.mxu0 0
    %231 = vmatpush1.bf16.msra.mxu0 0
    %232 = vmatprep.mubr.bf16.mxu0 0
    %233 = vmatmul.mubr.bf16.gmra.mrb[0].mxu0 %v118
    %v234 = vpop.f32.mrb[0].mxu0
    %v235 = vadd.f32 0.0, %v234
    %v236 = vpop.f32.mrb[0].mxu0
    %v237 = vadd.f32 0.0, %v236
    %v238 = vpop.f32.mrb[0].mxu0
    %v239 = vadd.f32 0.0, %v238
    %v240 = vpop.f32.mrb[0].mxu0
    %v241 = vadd.f32 0.0, %v240
    %242 = vdwg.mxu0
    %v243 = vld [vmem:[%s5] sm:$0xff]
    %v244 = vld [vmem:[#allocation2] sm:$0xff]
    %v245 = vld [vmem:[#allocation2 + $0x8] sm:$0xff]
    %v246 = vadd.f32 %v244, %v235
    %v247 = vadd.f32 %v245, %v239
    %248 = vadd.xlane.f32.xlu0 %v246
    %v249 = vpop.xlane.xlu0 %248
    %250 = vadd.xlane.f32.xlu0 %v247
    %v251 = vpop.xlane.xlu0 %250
    %v252 = vmul.f32 %v249, 0.03125
    %v253 = vmul.f32 %v251, 0.03125
    %v254 = vsub.f32 %v246, %v252
    %v255 = vsub.f32 %v247, %v253
    %v256 = vsel %vm95, 1, 0
    %vm257 = vcmp.eq.s32.totalorder %v256, 1
    %v258 = vsel %vm257, %v254, 0.0
    %v259 = vsel %vm257, %v255, 0.0
    %v260 = vmul.f32 %v258, %v258
    %v261 = vmul.f32 %v259, %v259
    %262 = vadd.xlane.f32.xlu0 %v260
    %v263 = vpop.xlane.xlu0 %262
    %264 = vadd.xlane.f32.xlu0 %v261
    %v265 = vpop.xlane.xlu0 %264
    %v266 = vmul.f32 %v263, 0.03125
    %v267 = vmul.f32 %v265, 0.03125
    %v268 = vadd.f32 %v266, 1e-05
    %v269 = vadd.f32 %v267, 1e-05
    %v270 = vrsqrt.pop %v268
    %v271 = vrsqrt.pop %v269
    %v272 = vmul.f32 %v258, %v270
    %v273 = vmul.f32 %v259, %v271
    %v274 = vlaneseq
    %v275 = vshrl.u32 %v274, 7
    %v276 = vsub.s32 2, %v275
    %v277 = vrot.slane %v243, %v276
    %v278 = vmul.f32 %v272, %v277
    %v279 = vmul.f32 %v273, %v277
    %v280 = vlaneseq
    %v281 = vshrl.u32 %v280, 7
    %v282 = vsub.s32 3, %v281
    %v283 = vrot.slane %v243, %v282
    %v284 = vadd.f32 %v278, %v283
    %v285 = vadd.f32 %v279, %v283
    %v286 = vpack.c.bf16 %v285, %v284
    %v287 = vld [vmem:[#allocation8] sm:$0xf]
    %v288 = vld [vmem:[#allocation8 + $0x4] sm:$0xf]
    %v289 = vld [vmem:[#allocation8 + $0x8] sm:$0xf]
    %v290 = vld [vmem:[#allocation8 + $0xc] sm:$0xf]
    %v291 = vld [vmem:[#allocation8 + $0x10] sm:$0xf]
    %v292 = vld [vmem:[#allocation8 + $0x14] sm:$0xf]
    %v293 = vld [vmem:[#allocation8 + $0x18] sm:$0xf]
    %v294 = vld [vmem:[#allocation8 + $0x1c] sm:$0xf]
    %v295 = vld [vmem:[#allocation8 + $0x20] sm:$0xf]
    %v296 = vld [vmem:[#allocation8 + $0x24] sm:$0xf]
    %v297 = vld [vmem:[#allocation8 + $0x28] sm:$0xf]
    %v298 = vld [vmem:[#allocation8 + $0x2c] sm:$0xf]
    %v299 = vld [vmem:[#allocation8 + $0x30] sm:$0xf]
    %v300 = vld [vmem:[#allocation8 + $0x34] sm:$0xf]
    %v301 = vld [vmem:[#allocation8 + $0x38] sm:$0xf]
    %v302 = vld [vmem:[#allocation8 + $0x3c] sm:$0xf]
    %v303 = vlaneseq
    %v304 = vshrl.u32 %v303, 7
    %v305 = vsub.s32 0, %v304
    %v306 = vrot.slane %v243, %v305
    %v323 = vunpack.c.l.b16 %v287
    %v324 = vunpack.c.l.b16 %v288
    %v325 = vunpack.c.l.b16 %v289
    %v326 = vunpack.c.l.b16 %v290
    %v327 = vunpack.c.l.b16 %v291
    %v328 = vunpack.c.l.b16 %v292
    %v329 = vunpack.c.l.b16 %v293
    %v330 = vunpack.c.l.b16 %v294
    %v331 = vunpack.c.l.b16 %v295
    %v332 = vunpack.c.l.b16 %v296
    %v333 = vunpack.c.l.b16 %v297
    %v334 = vunpack.c.l.b16 %v298
    %v335 = vunpack.c.l.b16 %v299
    %v336 = vunpack.c.l.b16 %v300
    %v337 = vunpack.c.l.b16 %v301
    %v338 = vunpack.c.l.b16 %v302
    %v339 = vpack.c.b16 %v324, %v323
    %v340 = vpack.c.b16 %v326, %v325
    %v341 = vpack.c.b16 %v328, %v327
    %v342 = vpack.c.b16 %v330, %v329
    %v343 = vpack.c.b16 %v332, %v331
    %v344 = vpack.c.b16 %v334, %v333
    %v345 = vpack.c.b16 %v336, %v335
    %v346 = vpack.c.b16 %v338, %v337
    %355 = vmatprep.subr.bf16.mxu0 0
    %356 = vmatpush1.bf16.msra.mxu0 %v339
    %357 = vmatprep.subr.bf16.mxu0 0
    %358 = vmatpush1.bf16.msra.mxu0 %v340
    %359 = vmatprep.subr.bf16.mxu0 0
    %360 = vmatpush1.bf16.msra.mxu0 %v341
    %361 = vmatprep.subr.bf16.mxu0 0
    %362 = vmatpush1.bf16.msra.mxu0 %v342
    %363 = vmatprep.subr.bf16.mxu0 0
    %364 = vmatpush1.bf16.msra.mxu0 %v343
    %365 = vmatprep.subr.bf16.mxu0 0
    %366 = vmatpush1.bf16.msra.mxu0 %v344
    %367 = vmatprep.subr.bf16.mxu0 0
    %368 = vmatpush1.bf16.msra.mxu0 %v345
    %369 = vmatprep.subr.bf16.mxu0 0
    %370 = vmatpush1.bf16.msra.mxu0 %v346
    %371 = vmatprep.subr.bf16.mxu0 0
    %372 = vmatpush1.bf16.msra.mxu0 0
    %373 = vmatprep.subr.bf16.mxu0 0
    %374 = vmatpush1.bf16.msra.mxu0 0
    %375 = vmatprep.subr.bf16.mxu0 0
    %376 = vmatpush1.bf16.msra.mxu0 0
    %377 = vmatprep.subr.bf16.mxu0 0
    %378 = vmatpush1.bf16.msra.mxu0 0
    %379 = vmatprep.subr.bf16.mxu0 0
    %380 = vmatpush1.bf16.msra.mxu0 0
    %381 = vmatprep.subr.bf16.mxu0 0
    %382 = vmatpush1.bf16.msra.mxu0 0
    %383 = vmatprep.subr.bf16.mxu0 0
    %384 = vmatpush1.bf16.msra.mxu0 0
    %385 = vmatprep.subr.bf16.mxu0 0
    %386 = vmatpush1.bf16.msra.mxu0 0
    %387 = vmatprep.mubr.bf16.mxu0 0
    %388 = vmatmul.mubr.bf16.gmra.mrb[0].mxu0 %v286
    %v389 = vpop.f32.mrb[0].mxu0
    %v390 = vadd.f32 %v306, %v389
    %v391 = vpop.f32.mrb[0].mxu0
    %v392 = vpop.f32.mrb[0].mxu0
    %v393 = vadd.f32 %v306, %v392
    %v394 = vpop.f32.mrb[0].mxu0
    %395 = vdwg.mxu0
    %v396 = vmax.f32 %v390, 0.0
    %v397 = vmax.f32 %v393, 0.0
    %v398 = vpack.c.bf16 %v397, %v396
    %v399 = vld [vmem:[#allocation10] sm:$0xf]
    %v400 = vld [vmem:[#allocation10 + $0x4] sm:$0xf]
    %v401 = vld [vmem:[#allocation10 + $0x8] sm:$0xf]
    %v402 = vld [vmem:[#allocation10 + $0xc] sm:$0xf]
    %v403 = vld [vmem:[#allocation10 + $0x10] sm:$0xf]
    %v404 = vld [vmem:[#allocation10 + $0x14] sm:$0xf]
    %v405 = vld [vmem:[#allocation10 + $0x18] sm:$0xf]
    %v406 = vld [vmem:[#allocation10 + $0x1c] sm:$0xf]
    %v407 = vld [vmem:[#allocation10 + $0x20] sm:$0xf]
    %v408 = vld [vmem:[#allocation10 + $0x24] sm:$0xf]
    %v409 = vld [vmem:[#allocation10 + $0x28] sm:$0xf]
    %v410 = vld [vmem:[#allocation10 + $0x2c] sm:$0xf]
    %v411 = vld [vmem:[#allocation10 + $0x30] sm:$0xf]
    %v412 = vld [vmem:[#allocation10 + $0x34] sm:$0xf]
    %v413 = vld [vmem:[#allocation10 + $0x38] sm:$0xf]
    %v414 = vld [vmem:[#allocation10 + $0x3c] sm:$0xf]
    %v415 = vlaneseq
    %v416 = vshrl.u32 %v415, 7
    %v417 = vsub.s32 1, %v416
    %v418 = vrot.slane %v243, %v417
    %v435 = vunpack.c.l.b16 %v399
    %v436 = vunpack.c.l.b16 %v400
    %v437 = vunpack.c.l.b16 %v401
    %v438 = vunpack.c.l.b16 %v402
    %v439 = vunpack.c.l.b16 %v403
    %v440 = vunpack.c.l.b16 %v404
    %v441 = vunpack.c.l.b16 %v405
    %v442 = vunpack.c.l.b16 %v406
    %v443 = vunpack.c.l.b16 %v407
    %v444 = vunpack.c.l.b16 %v408
    %v445 = vunpack.c.l.b16 %v409
    %v446 = vunpack.c.l.b16 %v410
    %v447 = vunpack.c.l.b16 %v411
    %v448 = vunpack.c.l.b16 %v412
    %v449 = vunpack.c.l.b16 %v413
    %v450 = vunpack.c.l.b16 %v414
    %v451 = vpack.c.b16 %v436, %v435
    %v452 = vpack.c.b16 %v438, %v437
    %v453 = vpack.c.b16 %v440, %v439
    %v454 = vpack.c.b16 %v442, %v441
    %v455 = vpack.c.b16 %v444, %v443
    %v456 = vpack.c.b16 %v446, %v445
    %v457 = vpack.c.b16 %v448, %v447
    %v458 = vpack.c.b16 %v450, %v449
    %467 = vmatprep.subr.bf16.mxu0 0
    %468 = vmatpush1.bf16.msra.mxu0 %v451
    %469 = vmatprep.subr.bf16.mxu0 0
    %470 = vmatpush1.bf16.msra.mxu0 %v452
    %471 = vmatprep.subr.bf16.mxu0 0
    %472 = vmatpush1.bf16.msra.mxu0 %v453
    %473 = vmatprep.subr.bf16.mxu0 0
    %474 = vmatpush1.bf16.msra.mxu0 %v454
    %475 = vmatprep.subr.bf16.mxu0 0
    %476 = vmatpush1.bf16.msra.mxu0 %v455
    %477 = vmatprep.subr.bf16.mxu0 0
    %478 = vmatpush1.bf16.msra.mxu0 %v456
    %479 = vmatprep.subr.bf16.mxu0 0
    %480 = vmatpush1.bf16.msra.mxu0 %v457
    %481 = vmatprep.subr.bf16.mxu0 0
    %482 = vmatpush1.bf16.msra.mxu0 %v458
    %483 = vmatprep.subr.bf16.mxu0 0
    %484 = vmatpush1.bf16.msra.mxu0 0
    %485 = vmatprep.subr.bf16.mxu0 0
    %486 = vmatpush1.bf16.msra.mxu0 0
    %487 = vmatprep.subr.bf16.mxu0 0
    %488 = vmatpush1.bf16.msra.mxu0 0
    %489 = vmatprep.subr.bf16.mxu0 0
    %490 = vmatpush1.bf16.msra.mxu0 0
    %491 = vmatprep.subr.bf16.mxu0 0
    %492 = vmatpush1.bf16.msra.mxu0 0
    %493 = vmatprep.subr.bf16.mxu0 0
    %494 = vmatpush1.bf16.msra.mxu0 0
    %495 = vmatprep.subr.bf16.mxu0 0
    %496 = vmatpush1.bf16.msra.mxu0 0
    %497 = vmatprep.subr.bf16.mxu0 0
    %498 = vmatpush1.bf16.msra.mxu0 0
    %499 = vmatprep.mubr.bf16.mxu0 0
    %500 = vmatmul.mubr.bf16.gmra.mrb[0].mxu0 %v398
    %v501 = vpop.f32.mrb[0].mxu0
    %v502 = vadd.f32 %v418, %v501
    %v503 = vpop.f32.mrb[0].mxu0
    %v504 = vpop.f32.mrb[0].mxu0
    %v505 = vadd.f32 %v418, %v504
    %v506 = vpop.f32.mrb[0].mxu0
    %507 = vdwg.mxu0
    %v508 = vadd.f32 %v502, %v284
    %v509 = vadd.f32 %v505, %v285
    %510 = vadd.xlane.f32.xlu0 %v508
    %v511 = vpop.xlane.xlu0 %510
    %512 = vadd.xlane.f32.xlu0 %v509
    %v513 = vpop.xlane.xlu0 %512
    %v514 = vmul.f32 %v511, 0.03125
    %v515 = vmul.f32 %v513, 0.03125
    %v516 = vsub.f32 %v508, %v514
    %v517 = vsub.f32 %v509, %v515
    %v518 = vsel %vm257, %v516, 0.0
    %v519 = vsel %vm257, %v517, 0.0
    %v520 = vmul.f32 %v518, %v518
    %v521 = vmul.f32 %v519, %v519
    %522 = vadd.xlane.f32.xlu0 %v520
    %v523 = vpop.xlane.xlu0 %522
    %524 = vadd.xlane.f32.xlu0 %v521
    %v525 = vpop.xlane.xlu0 %524
    %v526 = vmul.f32 %v523, 0.03125
    %v527 = vmul.f32 %v525, 0.03125
    %v528 = vadd.f32 %v526, 1e-05
    %v529 = vadd.f32 %v527, 1e-05
    %v530 = vrsqrt.pop %v528
    %v531 = vrsqrt.pop %v529
    %v532 = vmul.f32 %v518, %v530
    %v533 = vmul.f32 %v519, %v531
    %v534 = vlaneseq
    %v535 = vshrl.u32 %v534, 7
    %v536 = vsub.s32 4, %v535
    %v537 = vrot.slane %v243, %v536
    %v538 = vmul.f32 %v532, %v537
    %v539 = vmul.f32 %v533, %v537
    %v540 = vlaneseq
    %v541 = vshrl.u32 %v540, 7
    %v542 = vsub.s32 5, %v541
    %v543 = vrot.slane %v243, %v542
    %v544 = vadd.f32 %v538, %v543
    %v545 = vadd.f32 %v539, %v543
    %546 = vst [vmem:[#allocation11] sm:$0xff] %v544
    %547 = vst [vmem:[#allocation11 + $0x8] sm:$0xff] %v545
    %s548 = scalar_lea.vmem %s5, 8
    %v549 = vld [vmem:[%s548] sm:$0xff]
    %s550 = scalar_lea.vmem [#allocation2], 16
    %v551 = vld [vmem:[%s550] sm:$0xff]
    %v552 = vld [vmem:[%s550 + $0x8] sm:$0xff]
    %v553 = vadd.f32 %v551, %v237
    %v554 = vadd.f32 %v552, %v241
    %555 = vadd.xlane.f32.xlu0 %v553
    %v556 = vpop.xlane.xlu0 %555
    %557 = vadd.xlane.f32.xlu0 %v554
    %v558 = vpop.xlane.xlu0 %557
    %v559 = vmul.f32 %v556, 0.03125
    %v560 = vmul.f32 %v558, 0.03125
    %v561 = vsub.f32 %v553, %v559
    %v562 = vsub.f32 %v554, %v560
    %v563 = vsel %vm257, %v561, 0.0
    %v564 = vsel %vm257, %v562, 0.0
    %v565 = vmul.f32 %v563, %v563
    %v566 = vmul.f32 %v564, %v564
    %567 = vadd.xlane.f32.xlu0 %v565
    %v568 = vpop.xlane.xlu0 %567
    %569 = vadd.xlane.f32.xlu0 %v566
    %v570 = vpop.xlane.xlu0 %569
    %v571 = vmul.f32 %v568, 0.03125
    %v572 = vmul.f32 %v570, 0.03125
    %v573 = vadd.f32 %v571, 1e-05
    %v574 = vadd.f32 %v572, 1e-05
    %v575 = vrsqrt.pop %v573
    %v576 = vrsqrt.pop %v574
    %v577 = vmul.f32 %v563, %v575
    %v578 = vmul.f32 %v564, %v576
    %v579 = vlaneseq
    %v580 = vshrl.u32 %v579, 7
    %v581 = vsub.s32 2, %v580
    %v582 = vrot.slane %v549, %v581
    %v583 = vmul.f32 %v577, %v582
    %v584 = vmul.f32 %v578, %v582
    %v585 = vlaneseq
    %v586 = vshrl.u32 %v585, 7
    %v587 = vsub.s32 3, %v586
    %v588 = vrot.slane %v549, %v587
    %v589 = vadd.f32 %v583, %v588
    %v590 = vadd.f32 %v584, %v588
    %v591 = vpack.c.bf16 %v590, %v589
    %s592 = scalar_lea.vmem [#allocation8], 64
    %v593 = vld [vmem:[%s592] sm:$0xf]
    %v594 = vld [vmem:[%s592 + $0x4] sm:$0xf]
    %v595 = vld [vmem:[%s592 + $0x8] sm:$0xf]
    %v596 = vld [vmem:[%s592 + $0xc] sm:$0xf]
    %v597 = vld [vmem:[%s592 + $0x10] sm:$0xf]
    %v598 = vld [vmem:[%s592 + $0x14] sm:$0xf]
    %v599 = vld [vmem:[%s592 + $0x18] sm:$0xf]
    %v600 = vld [vmem:[%s592 + $0x1c] sm:$0xf]
    %v601 = vld [vmem:[%s592 + $0x20] sm:$0xf]
    %v602 = vld [vmem:[%s592 + $0x24] sm:$0xf]
    %v603 = vld [vmem:[%s592 + $0x28] sm:$0xf]
    %v604 = vld [vmem:[%s592 + $0x2c] sm:$0xf]
    %v605 = vld [vmem:[%s592 + $0x30] sm:$0xf]
    %v606 = vld [vmem:[%s592 + $0x34] sm:$0xf]
    %v607 = vld [vmem:[%s592 + $0x38] sm:$0xf]
    %v608 = vld [vmem:[%s592 + $0x3c] sm:$0xf]
    %v609 = vlaneseq
    %v610 = vshrl.u32 %v609, 7
    %v611 = vsub.s32 0, %v610
    %v612 = vrot.slane %v549, %v611
    %v629 = vunpack.c.l.b16 %v593
    %v630 = vunpack.c.l.b16 %v594
    %v631 = vunpack.c.l.b16 %v595
    %v632 = vunpack.c.l.b16 %v596
    %v633 = vunpack.c.l.b16 %v597
    %v634 = vunpack.c.l.b16 %v598
    %v635 = vunpack.c.l.b16 %v599
    %v636 = vunpack.c.l.b16 %v600
    %v637 = vunpack.c.l.b16 %v601
    %v638 = vunpack.c.l.b16 %v602
    %v639 = vunpack.c.l.b16 %v603
    %v640 = vunpack.c.l.b16 %v604
    %v641 = vunpack.c.l.b16 %v605
    %v642 = vunpack.c.l.b16 %v606
    %v643 = vunpack.c.l.b16 %v607
    %v644 = vunpack.c.l.b16 %v608
    %v645 = vpack.c.b16 %v630, %v629
    %v646 = vpack.c.b16 %v632, %v631
    %v647 = vpack.c.b16 %v634, %v633
    %v648 = vpack.c.b16 %v636, %v635
    %v649 = vpack.c.b16 %v638, %v637
    %v650 = vpack.c.b16 %v640, %v639
    %v651 = vpack.c.b16 %v642, %v641
    %v652 = vpack.c.b16 %v644, %v643
    %661 = vmatprep.subr.bf16.mxu0 0
    %662 = vmatpush1.bf16.msra.mxu0 %v645
    %663 = vmatprep.subr.bf16.mxu0 0
    %664 = vmatpush1.bf16.msra.mxu0 %v646
    %665 = vmatprep.subr.bf16.mxu0 0
    %666 = vmatpush1.bf16.msra.mxu0 %v647
    %667 = vmatprep.subr.bf16.mxu0 0
    %668 = vmatpush1.bf16.msra.mxu0 %v648
    %669 = vmatprep.subr.bf16.mxu0 0
    %670 = vmatpush1.bf16.msra.mxu0 %v649
    %671 = vmatprep.subr.bf16.mxu0 0
    %672 = vmatpush1.bf16.msra.mxu0 %v650
    %673 = vmatprep.subr.bf16.mxu0 0
    %674 = vmatpush1.bf16.msra.mxu0 %v651
    %675 = vmatprep.subr.bf16.mxu0 0
    %676 = vmatpush1.bf16.msra.mxu0 %v652
    %677 = vmatprep.subr.bf16.mxu0 0
    %678 = vmatpush1.bf16.msra.mxu0 0
    %679 = vmatprep.subr.bf16.mxu0 0
    %680 = vmatpush1.bf16.msra.mxu0 0
    %681 = vmatprep.subr.bf16.mxu0 0
    %682 = vmatpush1.bf16.msra.mxu0 0
    %683 = vmatprep.subr.bf16.mxu0 0
    %684 = vmatpush1.bf16.msra.mxu0 0
    %685 = vmatprep.subr.bf16.mxu0 0
    %686 = vmatpush1.bf16.msra.mxu0 0
    %687 = vmatprep.subr.bf16.mxu0 0
    %688 = vmatpush1.bf16.msra.mxu0 0
    %689 = vmatprep.subr.bf16.mxu0 0
    %690 = vmatpush1.bf16.msra.mxu0 0
    %691 = vmatprep.subr.bf16.mxu0 0
    %692 = vmatpush1.bf16.msra.mxu0 0
    %693 = vmatprep.mubr.bf16.mxu0 0
    %694 = vmatmul.mubr.bf16.gmra.mrb[0].mxu0 %v591
    %v695 = vpop.f32.mrb[0].mxu0
    %v696 = vadd.f32 %v612, %v695
    %v697 = vpop.f32.mrb[0].mxu0
    %v698 = vpop.f32.mrb[0].mxu0
    %v699 = vadd.f32 %v612, %v698
    %v700 = vpop.f32.mrb[0].mxu0
    %701 = vdwg.mxu0
    %v702 = vmax.f32 %v696, 0.0
    %v703 = vmax.f32 %v699, 0.0
    %v704 = vpack.c.bf16 %v703, %v702
    %s705 = scalar_lea.vmem [#allocation10], 64
    %v706 = vld [vmem:[%s705] sm:$0xf]
    %v707 = vld [vmem:[%s705 + $0x4] sm:$0xf]
    %v708 = vld [vmem:[%s705 + $0x8] sm:$0xf]
    %v709 = vld [vmem:[%s705 + $0xc] sm:$0xf]
    %v710 = vld [vmem:[%s705 + $0x10] sm:$0xf]
    %v711 = vld [vmem:[%s705 + $0x14] sm:$0xf]
    %v712 = vld [vmem:[%s705 + $0x18] sm:$0xf]
    %v713 = vld [vmem:[%s705 + $0x1c] sm:$0xf]
    %v714 = vld [vmem:[%s705 + $0x20] sm:$0xf]
    %v715 = vld [vmem:[%s705 + $0x24] sm:$0xf]
    %v716 = vld [vmem:[%s705 + $0x28] sm:$0xf]
    %v717 = vld [vmem:[%s705 + $0x2c] sm:$0xf]
    %v718 = vld [vmem:[%s705 + $0x30] sm:$0xf]
    %v719 = vld [vmem:[%s705 + $0x34] sm:$0xf]
    %v720 = vld [vmem:[%s705 + $0x38] sm:$0xf]
    %v721 = vld [vmem:[%s705 + $0x3c] sm:$0xf]
    %v722 = vlaneseq
    %v723 = vshrl.u32 %v722, 7
    %v724 = vsub.s32 1, %v723
    %v725 = vrot.slane %v549, %v724
    %v742 = vunpack.c.l.b16 %v706
    %v743 = vunpack.c.l.b16 %v707
    %v744 = vunpack.c.l.b16 %v708
    %v745 = vunpack.c.l.b16 %v709
    %v746 = vunpack.c.l.b16 %v710
    %v747 = vunpack.c.l.b16 %v711
    %v748 = vunpack.c.l.b16 %v712
    %v749 = vunpack.c.l.b16 %v713
    %v750 = vunpack.c.l.b16 %v714
    %v751 = vunpack.c.l.b16 %v715
    %v752 = vunpack.c.l.b16 %v716
    %v753 = vunpack.c.l.b16 %v717
    %v754 = vunpack.c.l.b16 %v718
    %v755 = vunpack.c.l.b16 %v719
    %v756 = vunpack.c.l.b16 %v720
    %v757 = vunpack.c.l.b16 %v721
    %v758 = vpack.c.b16 %v743, %v742
    %v759 = vpack.c.b16 %v745, %v744
    %v760 = vpack.c.b16 %v747, %v746
    %v761 = vpack.c.b16 %v749, %v748
    %v762 = vpack.c.b16 %v751, %v750
    %v763 = vpack.c.b16 %v753, %v752
    %v764 = vpack.c.b16 %v755, %v754
    %v765 = vpack.c.b16 %v757, %v756
    %774 = vmatprep.subr.bf16.mxu0 0
    %775 = vmatpush1.bf16.msra.mxu0 %v758
    %776 = vmatprep.subr.bf16.mxu0 0
    %777 = vmatpush1.bf16.msra.mxu0 %v759
    %778 = vmatprep.subr.bf16.mxu0 0
    %779 = vmatpush1.bf16.msra.mxu0 %v760
    %780 = vmatprep.subr.bf16.mxu0 0
    %781 = vmatpush1.bf16.msra.mxu0 %v761
    %782 = vmatprep.subr.bf16.mxu0 0
    %783 = vmatpush1.bf16.msra.mxu0 %v762
    %784 = vmatprep.subr.bf16.mxu0 0
    %785 = vmatpush1.bf16.msra.mxu0 %v763
    %786 = vmatprep.subr.bf16.mxu0 0
    %787 = vmatpush1.bf16.msra.mxu0 %v764
    %788 = vmatprep.subr.bf16.mxu0 0
    %789 = vmatpush1.bf16.msra.mxu0 %v765
    %790 = vmatprep.subr.bf16.mxu0 0
    %791 = vmatpush1.bf16.msra.mxu0 0
    %792 = vmatprep.subr.bf16.mxu0 0
    %793 = vmatpush1.bf16.msra.mxu0 0
    %794 = vmatprep.subr.bf16.mxu0 0
    %795 = vmatpush1.bf16.msra.mxu0 0
    %796 = vmatprep.subr.bf16.mxu0 0
    %797 = vmatpush1.bf16.msra.mxu0 0
    %798 = vmatprep.subr.bf16.mxu0 0
    %799 = vmatpush1.bf16.msra.mxu0 0
    %800 = vmatprep.subr.bf16.mxu0 0
    %801 = vmatpush1.bf16.msra.mxu0 0
    %802 = vmatprep.subr.bf16.mxu0 0
    %803 = vmatpush1.bf16.msra.mxu0 0
    %804 = vmatprep.subr.bf16.mxu0 0
    %805 = vmatpush1.bf16.msra.mxu0 0
    %806 = vmatprep.mubr.bf16.mxu0 0
    %807 = vmatmul.mubr.bf16.gmra.mrb[0].mxu0 %v704
    %v808 = vpop.f32.mrb[0].mxu0
    %v809 = vadd.f32 %v725, %v808
    %v810 = vpop.f32.mrb[0].mxu0
    %v811 = vpop.f32.mrb[0].mxu0
    %v812 = vadd.f32 %v725, %v811
    %v813 = vpop.f32.mrb[0].mxu0
    %814 = vdwg.mxu0
    %v815 = vadd.f32 %v809, %v589
    %v816 = vadd.f32 %v812, %v590
    %817 = vadd.xlane.f32.xlu0 %v815
    %v818 = vpop.xlane.xlu0 %817
    %819 = vadd.xlane.f32.xlu0 %v816
    %v820 = vpop.xlane.xlu0 %819
    %v821 = vmul.f32 %v818, 0.03125
    %v822 = vmul.f32 %v820, 0.03125
    %v823 = vsub.f32 %v815, %v821
    %v824 = vsub.f32 %v816, %v822
    %v825 = vsel %vm257, %v823, 0.0
    %v826 = vsel %vm257, %v824, 0.0
    %v827 = vmul.f32 %v825, %v825
    %v828 = vmul.f32 %v826, %v826
    %829 = vadd.xlane.f32.xlu0 %v827
    %v830 = vpop.xlane.xlu0 %829
    %831 = vadd.xlane.f32.xlu0 %v828
    %v832 = vpop.xlane.xlu0 %831
    %v833 = vmul.f32 %v830, 0.03125
    %v834 = vmul.f32 %v832, 0.03125
    %v835 = vadd.f32 %v833, 1e-05
    %v836 = vadd.f32 %v834, 1e-05
    %v837 = vrsqrt.pop %v835
    %v838 = vrsqrt.pop %v836
    %v839 = vmul.f32 %v825, %v837
    %v840 = vmul.f32 %v826, %v838
    %v841 = vlaneseq
    %v842 = vshrl.u32 %v841, 7
    %v843 = vsub.s32 4, %v842
    %v844 = vrot.slane %v549, %v843
    %v845 = vmul.f32 %v839, %v844
    %v846 = vmul.f32 %v840, %v844
    %v847 = vlaneseq
    %v848 = vshrl.u32 %v847, 7
    %v849 = vsub.s32 5, %v848
    %v850 = vrot.slane %v549, %v849
    %v851 = vadd.f32 %v845, %v850
    %v852 = vadd.f32 %v846, %v850
    %s853 = scalar_lea.vmem [#allocation11], 16
    %854 = vst [vmem:[%s853] sm:$0xff] %v851
    %855 = vst [vmem:[%s853 + $0x8] sm:$0xff] %v852
    // Predicated region
    $region46: #{tpu_custom_call.1} parent=1 // pred_check
      _
    $region47: #{tpu_custom_call.1} parent=1 // pred_check_branch
      %857 = sbr.rel (0) target = $region49
    $region48: #{tpu_custom_call.1} parent=1 // pred_region
      %s859 = ssub.s32 512, 512
      %860 = vsyncadd [#allocation4], %s859
      %s861 = sshll.u32 [#allocation11], 4
      %s862 = int_to_ptr.vmem [resolvable:$true] %s861
      %867 = dma.vmem_to_hbm [thread:$0]  %s862, 512, %s6, [#allocation4], 128, 128, 8
    $region49: #{tpu_custom_call.1} parent=1 // pred_fallthru
      _
    // Predicated region
    $region50: #{tpu_custom_call.1} parent=1 // pred_check
      _
    $region51: #{tpu_custom_call.1} parent=1 // pred_check_branch
      %869 = sbr.rel (0) target = $region53
    $region52: #{tpu_custom_call.1} parent=1 // pred_region
      %870 = dma.done [#allocation4], 512
    $region53: #{tpu_custom_call.1} parent=1 // pred_fallthru
      _
    %871 = vsyncpa [#allocation3], 1
    %872 = vsyncpa [#allocation6], 1
    %873 = vsyncpa [#allocation9], 1
    %874 = vsyncpa [#allocation4], 1

</llo_original>
